<compile_context>
chip_gen: v5e
topology: v5e:2x2
jax: 0.10.0
libtpu: 0.0.40
codegen_flags: <defaults>
</compile_context>

<pallas_src>
import jax
import jax.numpy as jnp
import numpy as np
from jax.experimental import pallas as pl
from jax.experimental.pallas import tpu as pltpu


def _attn_pool_kernel(x_ref, wqkv_ref, b0_ref, bkvsp_ref, hb_ref, wc_ref,
                      bc_ref, o_ref):
    B, HW, C = x_ref.shape
    cdt = x_ref.dtype                                  # MXU-input dtype

    x = x_ref[...]                                     # (B, HW, C)

    # One fused projection [wq*scale | wk | wv]: (B*HW, C) x (C, 3C), f32 acc.
    qkv = jnp.dot(x.reshape(B * HW, C), wqkv_ref[...],
                  preferred_element_type=jnp.float32).reshape(B, HW, 3 * C)

    # Mean over spatial tokens yields the (scaled) query AND the mean token's
    # k/v in one reduction (linearity); the mean-token bias (pos_0 folded in)
    # is a single (1, 3C) add.
    mean3 = jnp.mean(qkv, axis=1) + b0_ref[...]                    # (B, 3C)
    q = mean3[:, :C]                                               # (B, C)
    k0 = mean3[:, C:2 * C]                                         # (B, C)
    v0 = mean3[:, 2 * C:]                                          # (B, C)

    # Spatial k/v with pos-folded per-position biases.
    kv_sp = qkv[:, :, C:] + bkvsp_ref[...]                         # (B, HW, 2C)
    k_sp = kv_sp[:, :, :C]
    v_sp = kv_sp[:, :, C:]

    # Head-broadcast scores: hb[c, c'] = [head(c) == head(c')], so (q*k) @ hb
    # puts head(c')'s score on every lane c' of that head. Everything stays
    # lane-dense (C on lanes); no per-head loop, no (.., H)-lane tensors.
    qk_sp = (q[:, None, :] * k_sp).astype(cdt).reshape(B * HW, C)
    s_sp = jnp.dot(qk_sp, hb_ref[...],
                   preferred_element_type=jnp.float32).reshape(B, HW, C)
    s0 = jnp.dot((q * k0).astype(cdt), hb_ref[...],
                 preferred_element_type=jnp.float32)               # (B, C)

    # Softmax over the L = HW + 1 keys (mean token handled separately), f32.
    m = jnp.maximum(jnp.max(s_sp, axis=1), s0)                     # (B, C)
    e_sp = jnp.exp(s_sp - m[:, None, :])                           # (B, HW, C)
    e0 = jnp.exp(s0 - m)                                           # (B, C)
    rcp = pl.reciprocal(jnp.sum(e_sp, axis=1) + e0, approx=True)   # (B, C)

    # Weighted value sum: probabilities are already broadcast across head
    # lanes, so this is a plain VPU multiply + sublane reduce.
    # TODO(synk): for HW >= 49 move this reduction onto the MXU (P @ V).
    acc = jnp.sum(e_sp * v_sp, axis=1) + e0 * v0                   # (B, C)
    attn = acc * rcp                                               # (B, C)

    # Output projection -- (B, C) x (C, out_dim_pad), lane-dense store.
    out = jnp.dot(attn.astype(wc_ref.dtype), wc_ref[...],
                  preferred_element_type=jnp.float32) + bc_ref[...]
    o_ref[...] = out.astype(o_ref.dtype)


def attention_pool_2d(x, params, *, num_heads, batch_tile=None,
                      compute_dtype=jnp.bfloat16):
    """x: (N, C, H, W) float32; returns (N, output_dim) float32."""
    N, C, H, W = x.shape
    HW = H * W
    head_dim = C // num_heads
    out_dim = params["wc"].shape[0]
    out_dim_pad = max(128, pl.cdiv(out_dim, 128) * 128)   # lane-dense output

    if batch_tile is None:
        if N >= 32:
            batch_tile = 16      # M = batch_tile*HW fills a 256-wide MXU pass
        elif N > 8:
            batch_tile = 8       # keep grid >= 2 so v7x's two TCs both run
        else:
            batch_tile = N
    n_pad = pl.cdiv(N, batch_tile) * batch_tile

    # ---- layout glue kept in XLA: NCHW -> (N, HW, C) ----
    xf = jnp.transpose(x.reshape(N, C, HW), (0, 2, 1))             # (N, HW, C)
    if n_pad != N:
        xf = jnp.pad(xf, ((0, n_pad - N), (0, 0), (0, 0)))

    # ---- weight prep (one-time per call; constant-folded under jit) ----
    scale = head_dim ** -0.5
    pos = params["pos"]                                            # (L, C)
    wqT, wkT, wvT = params["wq"].T, params["wk"].T, params["wv"].T
    wcT = params["wc"].T                                           # (C, out_dim)

    w_qkv = jnp.concatenate([wqT * scale, wkT, wvT], axis=1)       # (C, 3C)
    w_kv = w_qkv[:, C:]                                            # (C, 2C)
    b_kv = jnp.concatenate([params["bk"], params["bv"]])           # (2C,)
    b_kv_all = pos @ w_kv + b_kv[None, :]                          # (L, 2C) pos folded
    bq_eff = (pos[0:1] @ wqT + params["bq"][None, :]) * scale      # (1, C)
    b0 = jnp.concatenate([bq_eff, b_kv_all[0:1]], axis=1)          # (1, 3C) mean token
    b_kv_sp = b_kv_all[1:]                                         # (HW, 2C) spatial

    bc = params["bc"].reshape(1, out_dim)
    if out_dim_pad != out_dim:
        wcT = jnp.pad(wcT, ((0, 0), (0, out_dim_pad - out_dim)))
        bc = jnp.pad(bc, ((0, 0), (0, out_dim_pad - out_dim)))

    # Single pre-multiplied head-broadcast matrix (exact 0/1 entries).
    head_ids = jnp.arange(C, dtype=jnp.int32) // head_dim
    hb = (head_ids[:, None] == head_ids[None, :]).astype(jnp.float32)  # (C, C)

    # Only MXU inputs are narrowed; biases & softmax stay f32.
    cdt = compute_dtype if compute_dtype is not None else xf.dtype
    xf_c = xf.astype(cdt)
    w_qkv_c = w_qkv.astype(cdt)
    hb_c = hb.astype(cdt)
    wc_c = wcT.astype(cdt)

    itemsize = lambda d: jnp.dtype(d).itemsize
    full = lambda shape: pl.BlockSpec(shape, lambda b: (0,) * len(shape))
    grid = (n_pad // batch_tile,)

    # Rough double-buffered block footprint; make the VMEM budget explicit
    # only when it exceeds the ~32 MiB scoped default (large embed_dim).
    blk_bytes = (
        batch_tile * HW * C * itemsize(cdt)        # activations
        + 3 * C * C * itemsize(cdt)                # fused w_qkv
        + (3 * C + HW * 2 * C) * 4                 # f32 biases
        + C * C * itemsize(cdt)                    # head-broadcast matrix
        + (C + 1) * out_dim_pad * itemsize(cdt)    # wc + bc (bc counted wide)
        + batch_tile * out_dim_pad * 4)            # output block
    vmem_est = 2 * blk_bytes
    cp_kwargs = dict(dimension_semantics=("parallel",))
    if vmem_est > 24 * 1024 * 1024:
        # v7x has only 64 MiB physical VMEM; cap and leave headroom.
        cp_kwargs["vmem_limit_bytes"] = int(min(vmem_est * 2, 96 * 1024 * 1024))

    cost = pl.CostEstimate(
        flops=(2 * n_pad * HW * C * 3 * C            # fused qkv projection
               + 2 * n_pad * (HW + 1) * C * C        # head-broadcast scores
               + 2 * n_pad * C * out_dim_pad),       # output projection
        transcendentals=n_pad * (HW + 1) * C,
        bytes_accessed=(n_pad * HW * C * itemsize(cdt)
                        + (3 * C * C + C * C + C * out_dim_pad) * itemsize(cdt)
                        + (3 * C + HW * 2 * C + out_dim_pad) * 4
                        + n_pad * out_dim_pad * 4))

    out = pl.pallas_call(
        _attn_pool_kernel,
        out_shape=jax.ShapeDtypeStruct((n_pad, out_dim_pad), jnp.float32),
        grid=grid,
        in_specs=[
            pl.BlockSpec((batch_tile, HW, C), lambda b: (b, 0, 0)),  # activations
            full((C, 3 * C)),                                        # fused wq|wk|wv
            full((1, 3 * C)),                                        # mean-token bias
            full((HW, 2 * C)),                                       # spatial kv biases
            full((C, C)),                                            # head-broadcast
            full((C, out_dim_pad)),                                  # wc
            full((1, out_dim_pad)),                                  # bc
        ],
        out_specs=pl.BlockSpec((batch_tile, out_dim_pad), lambda b: (b, 0)),
        compiler_params=pltpu.CompilerParams(**cp_kwargs),
        cost_estimate=cost,
    )(xf_c, w_qkv_c, b0, b_kv_sp, hb_c, wc_c, bc)

    return out[:N, :out_dim]


def reference_forward(x, params, num_heads):
    """Pure-JAX replica of the PyTorch forward, for validation."""
    N, C, H, W = x.shape
    hd = C // num_heads
    xf = x.reshape(N, C, H * W).transpose(2, 0, 1)                    # (HW, N, C)
    xf = jnp.concatenate([xf.mean(axis=0, keepdims=True), xf], 0)     # (L, N, C)
    xf = xf + params["pos"][:, None, :]
    L = xf.shape[0]

    q = xf[:1] @ params["wq"].T + params["bq"]                        # (1, N, C)
    k = xf @ params["wk"].T + params["bk"]                            # (L, N, C)
    v = xf @ params["wv"].T + params["bv"]                            # (L, N, C)

    qh = q.reshape(1, N, num_heads, hd) * (hd ** -0.5)
    kh = k.reshape(L, N, num_heads, hd)
    vh = v.reshape(L, N, num_heads, hd)
    scores = jnp.einsum("qnhd,knhd->nhqk", qh, kh)
    p = jax.nn.softmax(scores, axis=-1)
    o = jnp.einsum("nhqk,knhd->qnhd", p, vh).reshape(1, N, C)
    out = o @ params["wc"].T + params["bc"]
    return out[0]                                                     # (N, out_dim)


def make_params(key, spacial_dim, embed_dim, output_dim):
    L = spacial_dim ** 2 + 1
    ks = jax.random.split(key, 9)
    return {
        "pos": jax.random.normal(ks[0], (L, embed_dim), jnp.float32)
               / (embed_dim ** 0.5),
        "wq": 0.1 * jax.random.normal(ks[1], (embed_dim, embed_dim), jnp.float32),
        "wk": 0.1 * jax.random.normal(ks[2], (embed_dim, embed_dim), jnp.float32),
        "wv": 0.1 * jax.random.normal(ks[3], (embed_dim, embed_dim), jnp.float32),
        "wc": 0.1 * jax.random.normal(ks[4], (output_dim, embed_dim), jnp.float32),
        "bq": 0.01 * jax.random.normal(ks[5], (embed_dim,), jnp.float32),
        "bk": 0.01 * jax.random.normal(ks[6], (embed_dim,), jnp.float32),
        "bv": 0.01 * jax.random.normal(ks[7], (embed_dim,), jnp.float32),
        "bc": 0.01 * jax.random.normal(ks[8], (output_dim,), jnp.float32),
    }


if __name__ == "__main__":
    # AttentionPool2d(spacial_dim=4, embed_dim=128, num_heads=4, output_dim=128)
    # on x of shape (N=16, C=128, H=4, W=4); default batch_tile=8 -> grid of 2
    # batch blocks (both TensorCores on v7x).
    N, C, S = 16, 128, 4
    num_heads, out_dim = 4, 128

    key = jax.random.PRNGKey(0)
    kx, kp = jax.random.split(key)
    x = jax.random.normal(kx, (N, C, S, S), jnp.float32)
    params = make_params(kp, S, C, out_dim)

    attn = jax.jit(attention_pool_2d,
                   static_argnames=("num_heads", "batch_tile", "compute_dtype"))

    y_ref = reference_forward(x, params, num_heads)

    # f32 MXU-input path (tightest check; tolerance covers the approximate
    # EUP reciprocal in the softmax denominator).
    y_f32 = jax.block_until_ready(
        attn(x, params, num_heads=num_heads, compute_dtype=jnp.float32))
    np.testing.assert_allclose(np.asarray(y_f32), np.asarray(y_ref),
                               rtol=5e-3, atol=5e-3)

    # Default configuration: bf16 MXU inputs, f32 accumulation + f32 softmax.
    y = jax.block_until_ready(attn(x, params, num_heads=num_heads))
    np.testing.assert_allclose(np.asarray(y), np.asarray(y_ref),
                               rtol=5e-2, atol=5e-2)
    assert y.shape == (N, out_dim)

    print("KERNEL_OK")
</pallas_src>

<mosaic_0001>
module attributes {stable_mosaic.version = 11 : i64} {
  func.func @_attn_pool_kernel(%arg0: i32, %arg1: memref<8x16x128xf32, #tpu.memory_space<vmem>>, %arg2: memref<128x384xf32, #tpu.memory_space<vmem>>, %arg3: memref<1x384xf32, #tpu.memory_space<vmem>>, %arg4: memref<16x256xf32, #tpu.memory_space<vmem>>, %arg5: memref<128x128xf32, #tpu.memory_space<vmem>>, %arg6: memref<128x128xf32, #tpu.memory_space<vmem>>, %arg7: memref<1x128xf32, #tpu.memory_space<vmem>>, %arg8: memref<8x128xf32, #tpu.memory_space<vmem>>) attributes {dimension_semantics = [#tpu.dimension_semantics<parallel>], iteration_bounds = array<i64: 2>, scalar_prefetch = 0 : i64, scratch_operands = 0 : i64, tpu.core_type = #tpu.core_type<tc>, window_params = [{transform_indices = @transform_0, window_bounds = array<i64: 8, 16, 128>}, {pipeline_mode = #tpu.pipeline_mode<synchronous>, transform_indices = @transform_1, window_bounds = array<i64: 128, 384>}, {pipeline_mode = #tpu.pipeline_mode<synchronous>, transform_indices = @transform_2, window_bounds = array<i64: 1, 384>}, {pipeline_mode = #tpu.pipeline_mode<synchronous>, transform_indices = @transform_3, window_bounds = array<i64: 16, 256>}, {pipeline_mode = #tpu.pipeline_mode<synchronous>, transform_indices = @transform_4, window_bounds = array<i64: 128, 128>}, {pipeline_mode = #tpu.pipeline_mode<synchronous>, transform_indices = @transform_5, window_bounds = array<i64: 128, 128>}, {pipeline_mode = #tpu.pipeline_mode<synchronous>, transform_indices = @transform_6, window_bounds = array<i64: 1, 128>}, {transform_indices = @transform_7, window_bounds = array<i64: 8, 128>}]} {
    %c0 = arith.constant 0 : index
    %c0_0 = arith.constant 0 : index
    %c0_1 = arith.constant 0 : index
    %0 = vector.load %arg1[%c0, %c0_0, %c0_1] : memref<8x16x128xf32, #tpu.memory_space<vmem>>, vector<8x16x128xf32>
    %1 = vector.shape_cast %0 : vector<8x16x128xf32> to vector<128x128xf32>
    %c0_2 = arith.constant 0 : index
    %c0_3 = arith.constant 0 : index
    %2 = vector.load %arg2[%c0_2, %c0_3] : memref<128x384xf32, #tpu.memory_space<vmem>>, vector<128x384xf32>
    %cst = arith.constant dense<0.000000e+00> : vector<128x384xf32>
    %3 = tpu.matmul %1, %2, %cst {dimension_numbers = #tpu.dot_dimension_numbers<[1], [0], [0], [1], [0, 0, 1, 1], [], []>} : vector<128x128xf32>, vector<128x384xf32>, vector<128x384xf32> -> vector<128x384xf32>
    %4 = vector.shape_cast %3 : vector<128x384xf32> to vector<8x16x384xf32>
    %cst_4 = arith.constant dense<0.000000e+00> : vector<8x384xf32>
    %5 = vector.multi_reduction <add>, %4, %cst_4 [1] : vector<8x16x384xf32> to vector<8x384xf32>
    %cst_5 = arith.constant 1.600000e+01 : f32
    %6 = vector.broadcast %cst_5 : f32 to vector<8x384xf32>
    %7 = arith.divf %5, %6 : vector<8x384xf32>
    %c0_6 = arith.constant 0 : index
    %c0_7 = arith.constant 0 : index
    %8 = vector.load %arg3[%c0_6, %c0_7] : memref<1x384xf32, #tpu.memory_space<vmem>>, vector<1x384xf32>
    %9 = vector.broadcast %8 : vector<1x384xf32> to vector<8x384xf32>
    %10 = arith.addf %7, %9 : vector<8x384xf32>
    %11 = vector.extract_strided_slice %10 {offsets = [0, 0], sizes = [8, 128], strides = [1, 1]} : vector<8x384xf32> to vector<8x128xf32>
    %12 = vector.extract_strided_slice %10 {offsets = [0, 128], sizes = [8, 128], strides = [1, 1]} : vector<8x384xf32> to vector<8x128xf32>
    %13 = vector.extract_strided_slice %10 {offsets = [0, 256], sizes = [8, 128], strides = [1, 1]} : vector<8x384xf32> to vector<8x128xf32>
    %14 = vector.extract_strided_slice %4 {offsets = [0, 0, 128], sizes = [8, 16, 256], strides = [1, 1, 1]} : vector<8x16x384xf32> to vector<8x16x256xf32>
    %c0_8 = arith.constant 0 : index
    %c0_9 = arith.constant 0 : index
    %15 = vector.load %arg4[%c0_8, %c0_9] : memref<16x256xf32, #tpu.memory_space<vmem>>, vector<16x256xf32>
    %16 = vector.shape_cast %15 : vector<16x256xf32> to vector<1x16x256xf32>
    %17 = vector.broadcast %16 : vector<1x16x256xf32> to vector<8x16x256xf32>
    %18 = arith.addf %14, %17 : vector<8x16x256xf32>
    %19 = vector.extract_strided_slice %18 {offsets = [0, 0, 0], sizes = [8, 16, 128], strides = [1, 1, 1]} : vector<8x16x256xf32> to vector<8x16x128xf32>
    %20 = vector.extract_strided_slice %18 {offsets = [0, 0, 128], sizes = [8, 16, 128], strides = [1, 1, 1]} : vector<8x16x256xf32> to vector<8x16x128xf32>
    %21 = vector.shape_cast %11 : vector<8x128xf32> to vector<8x1x128xf32>
    %22 = vector.broadcast %21 : vector<8x1x128xf32> to vector<8x16x128xf32>
    %23 = arith.mulf %22, %19 : vector<8x16x128xf32>
    %24 = vector.shape_cast %23 : vector<8x16x128xf32> to vector<128x128xf32>
    %c0_10 = arith.constant 0 : index
    %c0_11 = arith.constant 0 : index
    %25 = vector.load %arg5[%c0_10, %c0_11] : memref<128x128xf32, #tpu.memory_space<vmem>>, vector<128x128xf32>
    %cst_12 = arith.constant dense<0.000000e+00> : vector<128x128xf32>
    %26 = tpu.matmul %24, %25, %cst_12 {dimension_numbers = #tpu.dot_dimension_numbers<[1], [0], [0], [1], [0, 0, 1, 1], [], []>} : vector<128x128xf32>, vector<128x128xf32>, vector<128x128xf32> -> vector<128x128xf32>
    %27 = vector.shape_cast %26 : vector<128x128xf32> to vector<8x16x128xf32>
    %28 = arith.mulf %11, %12 : vector<8x128xf32>
    %c0_13 = arith.constant 0 : index
    %c0_14 = arith.constant 0 : index
    %29 = vector.load %arg5[%c0_13, %c0_14] : memref<128x128xf32, #tpu.memory_space<vmem>>, vector<128x128xf32>
    %cst_15 = arith.constant dense<0.000000e+00> : vector<8x128xf32>
    %30 = tpu.matmul %28, %29, %cst_15 {dimension_numbers = #tpu.dot_dimension_numbers<[1], [0], [0], [1], [0, 0, 1, 1], [], []>} : vector<8x128xf32>, vector<128x128xf32>, vector<8x128xf32> -> vector<8x128xf32>
    %cst_16 = arith.constant dense<0xFF800000> : vector<8x128xf32>
    %31 = vector.multi_reduction <maximumf>, %27, %cst_16 [1] : vector<8x16x128xf32> to vector<8x128xf32>
    %32 = arith.maximumf %31, %30 : vector<8x128xf32>
    %33 = vector.shape_cast %32 : vector<8x128xf32> to vector<8x1x128xf32>
    %34 = vector.broadcast %33 : vector<8x1x128xf32> to vector<8x16x128xf32>
    %35 = arith.subf %27, %34 : vector<8x16x128xf32>
    %36 = math.exp %35 : vector<8x16x128xf32>
    %37 = arith.subf %30, %32 : vector<8x128xf32>
    %38 = math.exp %37 : vector<8x128xf32>
    %cst_17 = arith.constant dense<0.000000e+00> : vector<8x128xf32>
    %39 = vector.multi_reduction <add>, %36, %cst_17 [1] : vector<8x16x128xf32> to vector<8x128xf32>
    %40 = arith.addf %39, %38 : vector<8x128xf32>
    %41 = tpu.reciprocal %40 {approx = true} : vector<8x128xf32> -> vector<8x128xf32>
    %42 = arith.mulf %36, %20 : vector<8x16x128xf32>
    %cst_18 = arith.constant dense<0.000000e+00> : vector<8x128xf32>
    %43 = vector.multi_reduction <add>, %42, %cst_18 [1] : vector<8x16x128xf32> to vector<8x128xf32>
    %44 = arith.mulf %38, %13 : vector<8x128xf32>
    %45 = arith.addf %43, %44 : vector<8x128xf32>
    %46 = arith.mulf %45, %41 : vector<8x128xf32>
    %c0_19 = arith.constant 0 : index
    %c0_20 = arith.constant 0 : index
    %47 = vector.load %arg6[%c0_19, %c0_20] : memref<128x128xf32, #tpu.memory_space<vmem>>, vector<128x128xf32>
    %cst_21 = arith.constant dense<0.000000e+00> : vector<8x128xf32>
    %48 = tpu.matmul %46, %47, %cst_21 {dimension_numbers = #tpu.dot_dimension_numbers<[1], [0], [0], [1], [0, 0, 1, 1], [], []>} : vector<8x128xf32>, vector<128x128xf32>, vector<8x128xf32> -> vector<8x128xf32>
    %c0_22 = arith.constant 0 : index
    %c0_23 = arith.constant 0 : index
    %49 = vector.load %arg7[%c0_22, %c0_23] : memref<1x128xf32, #tpu.memory_space<vmem>>, vector<1x128xf32>
    %50 = vector.broadcast %49 : vector<1x128xf32> to vector<8x128xf32>
    %51 = arith.addf %48, %50 : vector<8x128xf32>
    %c0_24 = arith.constant 0 : index
    %c0_25 = arith.constant 0 : index
    %52 = vector.load %arg8[%c0_24, %c0_25] : memref<8x128xf32, #tpu.memory_space<vmem>>, vector<8x128xf32>
    tpu.vector_store %arg8[%c0_24, %c0_25], %51 {strides = array<i32>} : memref<8x128xf32, #tpu.memory_space<vmem>>, vector<8x128xf32>,
    return
  }
  func.func @transform_0(%arg0: i32) -> (i32, i32, i32) {
    %c0_i32 = arith.constant 0 : i32
    %c0_i32_0 = arith.constant 0 : i32
    %c0_i32_1 = arith.constant 0 : i32
    return %arg0, %c0_i32, %c0_i32_0 : i32, i32, i32
  }
  func.func @transform_1(%arg0: i32) -> (i32, i32) {
    %c0_i32 = arith.constant 0 : i32
    %c0_i32_0 = arith.constant 0 : i32
    %c0_i32_1 = arith.constant 0 : i32
    return %c0_i32, %c0_i32_0 : i32, i32
  }
  func.func @transform_2(%arg0: i32) -> (i32, i32) {
    %c0_i32 = arith.constant 0 : i32
    %c0_i32_0 = arith.constant 0 : i32
    %c0_i32_1 = arith.constant 0 : i32
    return %c0_i32, %c0_i32_0 : i32, i32
  }
  func.func @transform_3(%arg0: i32) -> (i32, i32) {
    %c0_i32 = arith.constant 0 : i32
    %c0_i32_0 = arith.constant 0 : i32
    %c0_i32_1 = arith.constant 0 : i32
    return %c0_i32, %c0_i32_0 : i32, i32
  }
  func.func @transform_4(%arg0: i32) -> (i32, i32) {
    %c0_i32 = arith.constant 0 : i32
    %c0_i32_0 = arith.constant 0 : i32
    %c0_i32_1 = arith.constant 0 : i32
    return %c0_i32, %c0_i32_0 : i32, i32
  }
  func.func @transform_5(%arg0: i32) -> (i32, i32) {
    %c0_i32 = arith.constant 0 : i32
    %c0_i32_0 = arith.constant 0 : i32
    %c0_i32_1 = arith.constant 0 : i32
    return %c0_i32, %c0_i32_0 : i32, i32
  }
  func.func @transform_6(%arg0: i32) -> (i32, i32) {
    %c0_i32 = arith.constant 0 : i32
    %c0_i32_0 = arith.constant 0 : i32
    %c0_i32_1 = arith.constant 0 : i32
    return %c0_i32, %c0_i32_0 : i32, i32
  }
  func.func @transform_7(%arg0: i32) -> (i32, i32) {
    %c0_i32 = arith.constant 0 : i32
    %c0_i32_0 = arith.constant 0 : i32
    return %arg0, %c0_i32 : i32, i32
  }
}

</mosaic_0001>

<llo_original>
// kernel: attention_pool_2d.1
$region0: #{attention_pool_2d.1}
  #allocation0 [shape = 'u32[]', space=smem, size = 0x4, offset = 0x4, fixed_abs, tag = 'smem constant byte address 0x4 - core index']
  #allocation1 [shape = 'u32[72,128]{1,0:T(1,128)}', space=vmem, size = 0x9000, scoped, tag = 'internal scratch']
  %s0 = inlined_call_operand.vmem [shape: f32[16,16,128], index: 0, kind: input, shape index: {}]
  %s1 = inlined_call_operand.vmem [shape: f32[128,384], index: 1, kind: input, shape index: {}]
  %s2 = inlined_call_operand.vmem [shape: f32[1,384], index: 2, kind: input, shape index: {}]
  %s3 = inlined_call_operand.vmem [shape: f32[16,256], index: 3, kind: input, shape index: {}]
  %s4 = inlined_call_operand.vmem [shape: f32[128,128], index: 4, kind: input, shape index: {}]
  %s5 = inlined_call_operand.vmem [shape: f32[128,128], index: 5, kind: input, shape index: {}]
  %s6 = inlined_call_operand.vmem [shape: f32[1,128], index: 6, kind: input, shape index: {}]
  %s7 = inlined_call_operand.hbm [shape: f32[16,128], index: 7, kind: output, shape index: {}]
  %s8 = sld [smem:[#allocation0]]
  $region61: #{attention_pool_2d.1} parent=0
    _
  %s10 = ssub.s32 1, %s8
  %s11 = scalar_select 0, %s10, %s8
  $region1: #{attention_pool_2d.1} parent=0
    #allocation2 [shape = 'u8[8192]{0}', space=vmem, size = 0x2000, scoped, tag = 'output window, operand 0']
    #allocation3 [shape = 's32[2]{0}', space=sflag, size = 0x8, scoped, tag = 'scoped memory for attention_pool_2d.1']
    %12 = vsyncpa [#allocation3], 0
    %s13 = scalar_lea.sflag [#allocation3], 1
    %14 = vsyncpa %s13, 0
    loop: start=0, step=1, limit=4
    $region2: #{attention_pool_2d.1} parent=1 // loop_pre_header
      _
    $region3: #{attention_pool_2d.1} parent=1 // loop_header
      %s16 = sphi 0, %s20
      %p17 = scmp.ge.s32.totalorder %s16, 4
      %s26 = sphi 0, %s28
      %s29 = sphi 0, %s26
      %s30 = sphi 0, %s29
      %s46 = sphi 0, %s30
      %s50 = sphi 0, %s50
      %s52 = sphi 0, %s50
      %s53 = sphi 0, %s52
      %s67 = sphi 0, %s53
      %s71 = sphi 0, %s71
      %s73 = sphi 0, %s71
      %s74 = sphi 0, %s73
      %s88 = sphi 0, %s74
      %s92 = sphi 0, %s92
      %s94 = sphi 0, %s92
      %s95 = sphi 0, %s94
      %s109 = sphi 0, %s95
      %s113 = sphi 0, %s113
      %s115 = sphi 0, %s113
      %s116 = sphi 0, %s115
      %s130 = sphi 0, %s116
      %s134 = sphi 0, %s134
      %s136 = sphi 0, %s134
      %s137 = sphi 0, %s136
      %s151 = sphi 0, %s137
      %s155 = sphi 0, %s155
      %s157 = sphi 0, %s155
      %s158 = sphi 0, %s157
      %s172 = sphi 0, %s158
      %s178 = sphi 0, %s180
      %s181 = sphi 0, %s178
      %s182 = sphi 0, %s181
      %s198 = sphi 0, %s182
    $region4: #{attention_pool_2d.1} parent=1 // loop_header_branch
      %19 = sbr.rel (%p17) target = $region8
    $region5: #{attention_pool_2d.1} parent=1 // loop_body
      %s21 = ssub.s32 %s16, 1
      %s22 = ssub.s32 %s16, 2
      %s23 = sadd.s32 %s16, 1
      %s24 = ssub.s32 %s16, %s23
      %p25 = scmp.eq.s32.totalorder %s24, 0
      %s27 = sadd.s32 %s26, 1
      %s28 = scalar_select %p25, %s26, %s27
      %p31 = pneg %p25
      %p32 = scmp.eq.s32.totalorder %s16, 1
      %p33 = por %p31, %p32
      %p34 = scmp.ne.s32.totalorder %s26, %s29
      %p35 = scmp.eq.s32.totalorder %s16, 0
      %p36 = por %p34, %p35
      %p37 = scmp.ne.s32.totalorder %s26, %s29
      %p38 = scmp.eq.s32.totalorder %s21, 1
      %p39 = por %p37, %p38
      %p40 = scmp.ne.s32.totalorder %s29, %s30
      %p41 = scmp.eq.s32.totalorder %s21, 0
      %p42 = por %p40, %p41
      %p43 = scmp.ne.s32.totalorder %s29, %s30
      %p44 = scmp.eq.s32.totalorder %s22, 1
      %p45 = por %p43, %p44
      %p47 = scmp.ne.s32.totalorder %s30, %s46
      %p48 = scmp.eq.s32.totalorder %s22, 0
      %p49 = por %p47, %p48
      %s51 = sadd.s32 %s50, 1
      %p54 = scmp.eq.s32.totalorder %s16, 1
      %p55 = scmp.ne.s32.totalorder %s50, %s52
      %p56 = scmp.eq.s32.totalorder %s16, 0
      %p57 = por %p55, %p56
      %p58 = scmp.ne.s32.totalorder %s50, %s52
      %p59 = scmp.eq.s32.totalorder %s21, 1
      %p60 = por %p58, %p59
      %p61 = scmp.ne.s32.totalorder %s52, %s53
      %p62 = scmp.eq.s32.totalorder %s21, 0
      %p63 = por %p61, %p62
      %p64 = scmp.ne.s32.totalorder %s52, %s53
      %p65 = scmp.eq.s32.totalorder %s22, 1
      %p66 = por %p64, %p65
      %p68 = scmp.ne.s32.totalorder %s53, %s67
      %p69 = scmp.eq.s32.totalorder %s22, 0
      %p70 = por %p68, %p69
      %s72 = sadd.s32 %s71, 1
      %p75 = scmp.eq.s32.totalorder %s16, 1
      %p76 = scmp.ne.s32.totalorder %s71, %s73
      %p77 = scmp.eq.s32.totalorder %s16, 0
      %p78 = por %p76, %p77
      %p79 = scmp.ne.s32.totalorder %s71, %s73
      %p80 = scmp.eq.s32.totalorder %s21, 1
      %p81 = por %p79, %p80
      %p82 = scmp.ne.s32.totalorder %s73, %s74
      %p83 = scmp.eq.s32.totalorder %s21, 0
      %p84 = por %p82, %p83
      %p85 = scmp.ne.s32.totalorder %s73, %s74
      %p86 = scmp.eq.s32.totalorder %s22, 1
      %p87 = por %p85, %p86
      %p89 = scmp.ne.s32.totalorder %s74, %s88
      %p90 = scmp.eq.s32.totalorder %s22, 0
      %p91 = por %p89, %p90
      %s93 = sadd.s32 %s92, 1
      %p96 = scmp.eq.s32.totalorder %s16, 1
      %p97 = scmp.ne.s32.totalorder %s92, %s94
      %p98 = scmp.eq.s32.totalorder %s16, 0
      %p99 = por %p97, %p98
      %p100 = scmp.ne.s32.totalorder %s92, %s94
      %p101 = scmp.eq.s32.totalorder %s21, 1
      %p102 = por %p100, %p101
      %p103 = scmp.ne.s32.totalorder %s94, %s95
      %p104 = scmp.eq.s32.totalorder %s21, 0
      %p105 = por %p103, %p104
      %p106 = scmp.ne.s32.totalorder %s94, %s95
      %p107 = scmp.eq.s32.totalorder %s22, 1
      %p108 = por %p106, %p107
      %p110 = scmp.ne.s32.totalorder %s95, %s109
      %p111 = scmp.eq.s32.totalorder %s22, 0
      %p112 = por %p110, %p111
      %s114 = sadd.s32 %s113, 1
      %p117 = scmp.eq.s32.totalorder %s16, 1
      %p118 = scmp.ne.s32.totalorder %s113, %s115
      %p119 = scmp.eq.s32.totalorder %s16, 0
      %p120 = por %p118, %p119
      %p121 = scmp.ne.s32.totalorder %s113, %s115
      %p122 = scmp.eq.s32.totalorder %s21, 1
      %p123 = por %p121, %p122
      %p124 = scmp.ne.s32.totalorder %s115, %s116
      %p125 = scmp.eq.s32.totalorder %s21, 0
      %p126 = por %p124, %p125
      %p127 = scmp.ne.s32.totalorder %s115, %s116
      %p128 = scmp.eq.s32.totalorder %s22, 1
      %p129 = por %p127, %p128
      %p131 = scmp.ne.s32.totalorder %s116, %s130
      %p132 = scmp.eq.s32.totalorder %s22, 0
      %p133 = por %p131, %p132
      %s135 = sadd.s32 %s134, 1
      %p138 = scmp.eq.s32.totalorder %s16, 1
      %p139 = scmp.ne.s32.totalorder %s134, %s136
      %p140 = scmp.eq.s32.totalorder %s16, 0
      %p141 = por %p139, %p140
      %p142 = scmp.ne.s32.totalorder %s134, %s136
      %p143 = scmp.eq.s32.totalorder %s21, 1
      %p144 = por %p142, %p143
      %p145 = scmp.ne.s32.totalorder %s136, %s137
      %p146 = scmp.eq.s32.totalorder %s21, 0
      %p147 = por %p145, %p146
      %p148 = scmp.ne.s32.totalorder %s136, %s137
      %p149 = scmp.eq.s32.totalorder %s22, 1
      %p150 = por %p148, %p149
      %p152 = scmp.ne.s32.totalorder %s137, %s151
      %p153 = scmp.eq.s32.totalorder %s22, 0
      %p154 = por %p152, %p153
      %s156 = sadd.s32 %s155, 1
      %p159 = scmp.eq.s32.totalorder %s16, 1
      %p160 = scmp.ne.s32.totalorder %s155, %s157
      %p161 = scmp.eq.s32.totalorder %s16, 0
      %p162 = por %p160, %p161
      %p163 = scmp.ne.s32.totalorder %s155, %s157
      %p164 = scmp.eq.s32.totalorder %s21, 1
      %p165 = por %p163, %p164
      %p166 = scmp.ne.s32.totalorder %s157, %s158
      %p167 = scmp.eq.s32.totalorder %s21, 0
      %p168 = por %p166, %p167
      %p169 = scmp.ne.s32.totalorder %s157, %s158
      %p170 = scmp.eq.s32.totalorder %s22, 1
      %p171 = por %p169, %p170
      %p173 = scmp.ne.s32.totalorder %s158, %s172
      %p174 = scmp.eq.s32.totalorder %s22, 0
      %p175 = por %p173, %p174
      %s176 = ssub.s32 %s16, %s23
      %p177 = scmp.eq.s32.totalorder %s176, 0
      %s179 = sadd.s32 %s178, 1
      %s180 = scalar_select %p177, %s178, %s179
      %p183 = pneg %p177
      %p184 = scmp.eq.s32.totalorder %s16, 1
      %p185 = por %p183, %p184
      %p186 = scmp.ne.s32.totalorder %s178, %s181
      %p187 = scmp.eq.s32.totalorder %s16, 0
      %p188 = por %p186, %p187
      %p189 = scmp.ne.s32.totalorder %s178, %s181
      %p190 = scmp.eq.s32.totalorder %s21, 1
      %p191 = por %p189, %p190
      %p192 = scmp.ne.s32.totalorder %s181, %s182
      %p193 = scmp.eq.s32.totalorder %s21, 0
      %p194 = por %p192, %p193
      %p195 = scmp.ne.s32.totalorder %s181, %s182
      %p196 = scmp.eq.s32.totalorder %s22, 1
      %p197 = por %p195, %p196
      %p199 = scmp.ne.s32.totalorder %s182, %s198
      %p200 = scmp.eq.s32.totalorder %s22, 0
      %p201 = por %p199, %p200
      %p202 = scmp.le.s32.totalorder 1, %s16
      %p203 = scmp.lt.s32.totalorder %s16, 3
      %p204 = pnand %p202, %p203
      %p205 = pneg %p204
      // Predicated region
      $region9: #{attention_pool_2d.1} parent=5 // pred_check
        _
      $region10: #{attention_pool_2d.1} parent=5 // pred_check_branch
        %207 = sbr.rel (%p204) target = $region12
      $region11: #{attention_pool_2d.1} parent=5 // pred_region
        %s208 = ssub.s32 %s16, 1
        // Predicated region
        $region13: #{attention_pool_2d.1} parent=11 // pred_check
          %p209 = pneg %p63
        $region14: #{attention_pool_2d.1} parent=11 // pred_check_branch
          %211 = sbr.rel (%p209) target = $region16
        $region15: #{attention_pool_2d.1} parent=11 // pred_region
          _
        $region16: #{attention_pool_2d.1} parent=11 // pred_fallthru
          _
        // Predicated region
        $region17: #{attention_pool_2d.1} parent=11 // pred_check
          %p212 = pneg %p84
        $region18: #{attention_pool_2d.1} parent=11 // pred_check_branch
          %214 = sbr.rel (%p212) target = $region20
        $region19: #{attention_pool_2d.1} parent=11 // pred_region
          _
        $region20: #{attention_pool_2d.1} parent=11 // pred_fallthru
          _
        // Predicated region
        $region21: #{attention_pool_2d.1} parent=11 // pred_check
          %p215 = pneg %p105
        $region22: #{attention_pool_2d.1} parent=11 // pred_check_branch
          %217 = sbr.rel (%p215) target = $region24
        $region23: #{attention_pool_2d.1} parent=11 // pred_region
          _
        $region24: #{attention_pool_2d.1} parent=11 // pred_fallthru
          _
        // Predicated region
        $region25: #{attention_pool_2d.1} parent=11 // pred_check
          %p218 = pneg %p126
        $region26: #{attention_pool_2d.1} parent=11 // pred_check_branch
          %220 = sbr.rel (%p218) target = $region28
        $region27: #{attention_pool_2d.1} parent=11 // pred_region
          _
        $region28: #{attention_pool_2d.1} parent=11 // pred_fallthru
          _
        // Predicated region
        $region29: #{attention_pool_2d.1} parent=11 // pred_check
          %p221 = pneg %p147
        $region30: #{attention_pool_2d.1} parent=11 // pred_check_branch
          %223 = sbr.rel (%p221) target = $region32
        $region31: #{attention_pool_2d.1} parent=11 // pred_region
          _
        $region32: #{attention_pool_2d.1} parent=11 // pred_fallthru
          _
        // Predicated region
        $region33: #{attention_pool_2d.1} parent=11 // pred_check
          %p224 = pneg %p168
        $region34: #{attention_pool_2d.1} parent=11 // pred_check_branch
          %226 = sbr.rel (%p224) target = $region36
        $region35: #{attention_pool_2d.1} parent=11 // pred_region
          _
        $region36: #{attention_pool_2d.1} parent=11 // pred_fallthru
          _
      $region12: #{attention_pool_2d.1} parent=5 // pred_fallthru
        _
      %p227 = scmp.lt.s32.totalorder %s16, 2
      // Predicated region
      $region37: #{attention_pool_2d.1} parent=5 // pred_check
        %p228 = pneg %p227
      $region38: #{attention_pool_2d.1} parent=5 // pred_check_branch
        %230 = sbr.rel (%p228) target = $region40
      $region39: #{attention_pool_2d.1} parent=5 // pred_region
        // Predicated region
        $region41: #{attention_pool_2d.1} parent=39 // pred_check
          %p231 = pneg %p36
        $region42: #{attention_pool_2d.1} parent=39 // pred_check_branch
          %233 = sbr.rel (%p231) target = $region44
        $region43: #{attention_pool_2d.1} parent=39 // pred_region
          %s234 = smul.u32 8, %s16
          %p235 = scmp.lt.s32.totalorder %s234, 15
          %s236 = scalar_select %p235, %s234, 15
          %s237 = smul.addr %s236, 2
          %s238 = smul.addr %s237, 8
          %s239 = scalar_lea.vmem %s0, %s238
          %s240 = smul.u32 8, %s16
        $region44: #{attention_pool_2d.1} parent=39 // pred_fallthru
          _
      $region40: #{attention_pool_2d.1} parent=5 // pred_fallthru
        _
      %p241 = scmp.le.s32.totalorder 1, %s16
      %p242 = scmp.lt.s32.totalorder %s16, 3
      %p243 = pnand %p241, %p242
      %p244 = pneg %p243
      // Predicated region
      $region45: #{attention_pool_2d.1} parent=5 // pred_check
        _
      $region46: #{attention_pool_2d.1} parent=5 // pred_check_branch
        %246 = sbr.rel (%p243) target = $region48
      $region47: #{attention_pool_2d.1} parent=5 // pred_region
        %s247 = ssub.s32 %s16, 1
        %s248 = smul.u32 8, %s21
        %p249 = scmp.lt.s32.totalorder %s248, 15
        %s250 = scalar_select %p249, %s248, 15
        %s251 = smul.addr %s250, 2
        %s252 = smul.addr %s251, 8
        %s253 = scalar_lea.vmem %s0, %s252
        %p254 = pneg %p42
        %p255 = pneg %p39
        %p256 = pneg %p63
        %p257 = pneg %p60
        %p258 = pneg %p84
        %p259 = pneg %p81
        %p260 = pneg %p105
        %p261 = pneg %p102
        %p262 = pneg %p126
        %p263 = pneg %p123
        %p264 = pneg %p147
        %p265 = pneg %p144
        %p266 = pneg %p168
        %p267 = pneg %p165
        %p268 = pneg %p194
        %p269 = pneg %p191
        %s270 = sand.u32 %s181, 1
        %s271 = scalar_lea.sflag [#allocation3], %s270
        %s272 = sand.u32 %s181, 1
        %s273 = smul.addr %s272, 8
        %s274 = scalar_lea.vmem [#allocation2], %s273
        %s275 = smul.u32 8, %s21
        %p276 = scmp.lt.s32.totalorder %s275, 15
        %s277 = scalar_select %p276, %s275, 15
        %s278 = smul.addr %s277, 2
        %s279 = smul.addr %s278, 8
        %s280 = scalar_lea.vmem %s0, %s279
        %s281 = smul.u32 8, %s21
        %v282 = vld [vmem:[%s280] sm:$0xff]
        %v283 = vld [vmem:[%s280 + $0x8] sm:$0xff]
        %v284 = vld [vmem:[%s280 + $0x10] sm:$0xff]
        %v285 = vld [vmem:[%s280 + $0x18] sm:$0xff]
        %v286 = vld [vmem:[%s280 + $0x20] sm:$0xff]
        %v287 = vld [vmem:[%s280 + $0x28] sm:$0xff]
        %v288 = vld [vmem:[%s280 + $0x30] sm:$0xff]
        %v289 = vld [vmem:[%s280 + $0x38] sm:$0xff]
        %v290 = vld [vmem:[%s280 + $0x40] sm:$0xff]
        %v291 = vld [vmem:[%s280 + $0x48] sm:$0xff]
        %v292 = vld [vmem:[%s280 + $0x50] sm:$0xff]
        %v293 = vld [vmem:[%s280 + $0x58] sm:$0xff]
        %v294 = vld [vmem:[%s280 + $0x60] sm:$0xff]
        %v295 = vld [vmem:[%s280 + $0x68] sm:$0xff]
        %v296 = vld [vmem:[%s280 + $0x70] sm:$0xff]
        %v297 = vld [vmem:[%s280 + $0x78] sm:$0xff]
        %v298 = vld [vmem:[%s1] sm:$0xff]
        %v299 = vld [vmem:[%s1 + $0x8] sm:$0xff]
        %v300 = vld [vmem:[%s1 + $0x10] sm:$0xff]
        %v301 = vld [vmem:[%s1 + $0x18] sm:$0xff]
        %v302 = vld [vmem:[%s1 + $0x20] sm:$0xff]
        %v303 = vld [vmem:[%s1 + $0x28] sm:$0xff]
        %v304 = vld [vmem:[%s1 + $0x30] sm:$0xff]
        %v305 = vld [vmem:[%s1 + $0x38] sm:$0xff]
        %v306 = vld [vmem:[%s1 + $0x40] sm:$0xff]
        %v307 = vld [vmem:[%s1 + $0x48] sm:$0xff]
        %v308 = vld [vmem:[%s1 + $0x50] sm:$0xff]
        %v309 = vld [vmem:[%s1 + $0x58] sm:$0xff]
        %v310 = vld [vmem:[%s1 + $0x60] sm:$0xff]
        %v311 = vld [vmem:[%s1 + $0x68] sm:$0xff]
        %v312 = vld [vmem:[%s1 + $0x70] sm:$0xff]
        %v313 = vld [vmem:[%s1 + $0x78] sm:$0xff]
        %v314 = vld [vmem:[%s1 + $0x80] sm:$0xff]
        %v315 = vld [vmem:[%s1 + $0x88] sm:$0xff]
        %v316 = vld [vmem:[%s1 + $0x90] sm:$0xff]
        %v317 = vld [vmem:[%s1 + $0x98] sm:$0xff]
        %v318 = vld [vmem:[%s1 + $0xa0] sm:$0xff]
        %v319 = vld [vmem:[%s1 + $0xa8] sm:$0xff]
        %v320 = vld [vmem:[%s1 + $0xb0] sm:$0xff]
        %v321 = vld [vmem:[%s1 + $0xb8] sm:$0xff]
        %v322 = vld [vmem:[%s1 + $0xc0] sm:$0xff]
        %v323 = vld [vmem:[%s1 + $0xc8] sm:$0xff]
        %v324 = vld [vmem:[%s1 + $0xd0] sm:$0xff]
        %v325 = vld [vmem:[%s1 + $0xd8] sm:$0xff]
        %v326 = vld [vmem:[%s1 + $0xe0] sm:$0xff]
        %v327 = vld [vmem:[%s1 + $0xe8] sm:$0xff]
        %v328 = vld [vmem:[%s1 + $0xf0] sm:$0xff]
        %v329 = vld [vmem:[%s1 + $0xf8] sm:$0xff]
        %v330 = vld [vmem:[%s1 + $0x100] sm:$0xff]
        %v331 = vld [vmem:[%s1 + $0x108] sm:$0xff]
        %v332 = vld [vmem:[%s1 + $0x110] sm:$0xff]
        %v333 = vld [vmem:[%s1 + $0x118] sm:$0xff]
        %v334 = vld [vmem:[%s1 + $0x120] sm:$0xff]
        %v335 = vld [vmem:[%s1 + $0x128] sm:$0xff]
        %v336 = vld [vmem:[%s1 + $0x130] sm:$0xff]
        %v337 = vld [vmem:[%s1 + $0x138] sm:$0xff]
        %v338 = vld [vmem:[%s1 + $0x140] sm:$0xff]
        %v339 = vld [vmem:[%s1 + $0x148] sm:$0xff]
        %v340 = vld [vmem:[%s1 + $0x150] sm:$0xff]
        %v341 = vld [vmem:[%s1 + $0x158] sm:$0xff]
        %v342 = vld [vmem:[%s1 + $0x160] sm:$0xff]
        %v343 = vld [vmem:[%s1 + $0x168] sm:$0xff]
        %v344 = vld [vmem:[%s1 + $0x170] sm:$0xff]
        %v345 = vld [vmem:[%s1 + $0x178] sm:$0xff]
        %346 = vmatpush.msra.mxu0 %v343
        %347 = vmatpush.msra.mxu0 %v340
        %348 = vmatpush.msra.mxu0 %v337
        %349 = vmatpush.msra.mxu0 %v334
        %350 = vmatpush.msra.mxu0 %v331
        %351 = vmatpush.msra.mxu0 %v328
        %352 = vmatpush.msra.mxu0 %v325
        %353 = vmatpush.msra.mxu0 %v322
        %354 = vmatpush.msra.mxu0 %v319
        %355 = vmatpush.msra.mxu0 %v316
        %356 = vmatpush.msra.mxu0 %v313
        %357 = vmatpush.msra.mxu0 %v310
        %358 = vmatpush.msra.mxu0 %v307
        %359 = vmatpush.msra.mxu0 %v304
        %360 = vmatpush.msra.mxu0 %v301
        %361 = vmatpush.msra.mxu0 %v298
        %362 = vmatmul.f32.gmra.mxu0 %v282
        %v363 = vpop.f32.mrf.mxu0
        %v364 = vadd.f32 0.0, %v363
        %365 = vmatmul.f32.gmra.mxu0 %v283
        %v366 = vpop.f32.mrf.mxu0
        %v367 = vadd.f32 0.0, %v366
        %368 = vmatmul.f32.gmra.mxu0 %v284
        %v369 = vpop.f32.mrf.mxu0
        %v370 = vadd.f32 0.0, %v369
        %371 = vmatmul.f32.gmra.mxu0 %v285
        %v372 = vpop.f32.mrf.mxu0
        %v373 = vadd.f32 0.0, %v372
        %374 = vmatmul.f32.gmra.mxu0 %v286
        %v375 = vpop.f32.mrf.mxu0
        %v376 = vadd.f32 0.0, %v375
        %377 = vmatmul.f32.gmra.mxu0 %v287
        %v378 = vpop.f32.mrf.mxu0
        %v379 = vadd.f32 0.0, %v378
        %380 = vmatmul.f32.gmra.mxu0 %v288
        %v381 = vpop.f32.mrf.mxu0
        %v382 = vadd.f32 0.0, %v381
        %383 = vmatmul.f32.gmra.mxu0 %v289
        %v384 = vpop.f32.mrf.mxu0
        %v385 = vadd.f32 0.0, %v384
        %386 = vmatmul.f32.gmra.mxu0 %v290
        %v387 = vpop.f32.mrf.mxu0
        %v388 = vadd.f32 0.0, %v387
        %389 = vmatmul.f32.gmra.mxu0 %v291
        %v390 = vpop.f32.mrf.mxu0
        %v391 = vadd.f32 0.0, %v390
        %392 = vmatmul.f32.gmra.mxu0 %v292
        %v393 = vpop.f32.mrf.mxu0
        %v394 = vadd.f32 0.0, %v393
        %395 = vmatmul.f32.gmra.mxu0 %v293
        %v396 = vpop.f32.mrf.mxu0
        %v397 = vadd.f32 0.0, %v396
        %398 = vmatmul.f32.gmra.mxu0 %v294
        %v399 = vpop.f32.mrf.mxu0
        %v400 = vadd.f32 0.0, %v399
        %401 = vmatmul.f32.gmra.mxu0 %v295
        %v402 = vpop.f32.mrf.mxu0
        %v403 = vadd.f32 0.0, %v402
        %404 = vmatmul.f32.gmra.mxu0 %v296
        %v405 = vpop.f32.mrf.mxu0
        %v406 = vadd.f32 0.0, %v405
        %407 = vmatmul.f32.gmra.mxu0 %v297
        %v408 = vpop.f32.mrf.mxu0
        %v409 = vadd.f32 0.0, %v408
        %410 = vdwg.mxu0
        %411 = vmatpush.msra.mxu0 %v344
        %412 = vmatpush.msra.mxu0 %v341
        %413 = vmatpush.msra.mxu0 %v338
        %414 = vmatpush.msra.mxu0 %v335
        %415 = vmatpush.msra.mxu0 %v332
        %416 = vmatpush.msra.mxu0 %v329
        %417 = vmatpush.msra.mxu0 %v326
        %418 = vmatpush.msra.mxu0 %v323
        %419 = vmatpush.msra.mxu0 %v320
        %420 = vmatpush.msra.mxu0 %v317
        %421 = vmatpush.msra.mxu0 %v314
        %422 = vmatpush.msra.mxu0 %v311
        %423 = vmatpush.msra.mxu0 %v308
        %424 = vmatpush.msra.mxu0 %v305
        %425 = vmatpush.msra.mxu0 %v302
        %426 = vmatpush.msra.mxu0 %v299
        %427 = vmatmul.f32.gmra.mxu0 %v282
        %v428 = vpop.f32.mrf.mxu0
        %v429 = vadd.f32 0.0, %v428
        %430 = vmatmul.f32.gmra.mxu0 %v283
        %v431 = vpop.f32.mrf.mxu0
        %v432 = vadd.f32 0.0, %v431
        %433 = vmatmul.f32.gmra.mxu0 %v284
        %v434 = vpop.f32.mrf.mxu0
        %v435 = vadd.f32 0.0, %v434
        %436 = vmatmul.f32.gmra.mxu0 %v285
        %v437 = vpop.f32.mrf.mxu0
        %v438 = vadd.f32 0.0, %v437
        %439 = vmatmul.f32.gmra.mxu0 %v286
        %v440 = vpop.f32.mrf.mxu0
        %v441 = vadd.f32 0.0, %v440
        %442 = vmatmul.f32.gmra.mxu0 %v287
        %v443 = vpop.f32.mrf.mxu0
        %v444 = vadd.f32 0.0, %v443
        %445 = vmatmul.f32.gmra.mxu0 %v288
        %v446 = vpop.f32.mrf.mxu0
        %v447 = vadd.f32 0.0, %v446
        %448 = vmatmul.f32.gmra.mxu0 %v289
        %v449 = vpop.f32.mrf.mxu0
        %v450 = vadd.f32 0.0, %v449
        %451 = vmatmul.f32.gmra.mxu0 %v290
        %v452 = vpop.f32.mrf.mxu0
        %v453 = vadd.f32 0.0, %v452
        %454 = vmatmul.f32.gmra.mxu0 %v291
        %v455 = vpop.f32.mrf.mxu0
        %v456 = vadd.f32 0.0, %v455
        %457 = vmatmul.f32.gmra.mxu0 %v292
        %v458 = vpop.f32.mrf.mxu0
        %v459 = vadd.f32 0.0, %v458
        %460 = vmatmul.f32.gmra.mxu0 %v293
        %v461 = vpop.f32.mrf.mxu0
        %v462 = vadd.f32 0.0, %v461
        %463 = vmatmul.f32.gmra.mxu0 %v294
        %v464 = vpop.f32.mrf.mxu0
        %v465 = vadd.f32 0.0, %v464
        %466 = vmatmul.f32.gmra.mxu0 %v295
        %v467 = vpop.f32.mrf.mxu0
        %v468 = vadd.f32 0.0, %v467
        %469 = vmatmul.f32.gmra.mxu0 %v296
        %v470 = vpop.f32.mrf.mxu0
        %v471 = vadd.f32 0.0, %v470
        %472 = vmatmul.f32.gmra.mxu0 %v297
        %v473 = vpop.f32.mrf.mxu0
        %v474 = vadd.f32 0.0, %v473
        %475 = vdwg.mxu0
        %476 = vmatpush.msra.mxu0 %v345
        %477 = vmatpush.msra.mxu0 %v342
        %478 = vmatpush.msra.mxu0 %v339
        %479 = vmatpush.msra.mxu0 %v336
        %480 = vmatpush.msra.mxu0 %v333
        %481 = vmatpush.msra.mxu0 %v330
        %482 = vmatpush.msra.mxu0 %v327
        %483 = vmatpush.msra.mxu0 %v324
        %484 = vmatpush.msra.mxu0 %v321
        %485 = vmatpush.msra.mxu0 %v318
        %486 = vmatpush.msra.mxu0 %v315
        %487 = vmatpush.msra.mxu0 %v312
        %488 = vmatpush.msra.mxu0 %v309
        %489 = vmatpush.msra.mxu0 %v306
        %490 = vmatpush.msra.mxu0 %v303
        %491 = vmatpush.msra.mxu0 %v300
        %492 = vmatmul.f32.gmra.mxu0 %v282
        %v493 = vpop.f32.mrf.mxu0
        %v494 = vadd.f32 0.0, %v493
        %495 = vmatmul.f32.gmra.mxu0 %v283
        %v496 = vpop.f32.mrf.mxu0
        %v497 = vadd.f32 0.0, %v496
        %498 = vmatmul.f32.gmra.mxu0 %v284
        %v499 = vpop.f32.mrf.mxu0
        %v500 = vadd.f32 0.0, %v499
        %501 = vmatmul.f32.gmra.mxu0 %v285
        %v502 = vpop.f32.mrf.mxu0
        %v503 = vadd.f32 0.0, %v502
        %504 = vmatmul.f32.gmra.mxu0 %v286
        %v505 = vpop.f32.mrf.mxu0
        %v506 = vadd.f32 0.0, %v505
        %507 = vmatmul.f32.gmra.mxu0 %v287
        %v508 = vpop.f32.mrf.mxu0
        %v509 = vadd.f32 0.0, %v508
        %510 = vmatmul.f32.gmra.mxu0 %v288
        %v511 = vpop.f32.mrf.mxu0
        %v512 = vadd.f32 0.0, %v511
        %513 = vmatmul.f32.gmra.mxu0 %v289
        %v514 = vpop.f32.mrf.mxu0
        %v515 = vadd.f32 0.0, %v514
        %516 = vmatmul.f32.gmra.mxu0 %v290
        %v517 = vpop.f32.mrf.mxu0
        %v518 = vadd.f32 0.0, %v517
        %519 = vmatmul.f32.gmra.mxu0 %v291
        %v520 = vpop.f32.mrf.mxu0
        %v521 = vadd.f32 0.0, %v520
        %522 = vmatmul.f32.gmra.mxu0 %v292
        %v523 = vpop.f32.mrf.mxu0
        %v524 = vadd.f32 0.0, %v523
        %525 = vmatmul.f32.gmra.mxu0 %v293
        %v526 = vpop.f32.mrf.mxu0
        %v527 = vadd.f32 0.0, %v526
        %528 = vmatmul.f32.gmra.mxu0 %v294
        %v529 = vpop.f32.mrf.mxu0
        %v530 = vadd.f32 0.0, %v529
        %531 = vmatmul.f32.gmra.mxu0 %v295
        %v532 = vpop.f32.mrf.mxu0
        %v533 = vadd.f32 0.0, %v532
        %534 = vmatmul.f32.gmra.mxu0 %v296
        %v535 = vpop.f32.mrf.mxu0
        %v536 = vadd.f32 0.0, %v535
        %537 = vmatmul.f32.gmra.mxu0 %v297
        %v538 = vpop.f32.mrf.mxu0
        %v539 = vadd.f32 0.0, %v538
        %540 = vdwg.mxu0
        %v541 = vadd.f32 %v364, %v367
        %v542 = vrot.slane %v541, 4
        %v543 = vadd.f32 %v541, %v542
        %v544 = vrot.slane %v543, 2
        %v545 = vadd.f32 %v543, %v544
        %v546 = vrot.slane %v545, 1
        %v547 = vadd.f32 %v545, %v546
        %v548 = vadd.f32 %v429, %v432
        %v549 = vrot.slane %v548, 4
        %v550 = vadd.f32 %v548, %v549
        %v551 = vrot.slane %v550, 2
        %v552 = vadd.f32 %v550, %v551
        %v553 = vrot.slane %v552, 1
        %v554 = vadd.f32 %v552, %v553
        %v555 = vadd.f32 %v494, %v497
        %v556 = vrot.slane %v555, 4
        %v557 = vadd.f32 %v555, %v556
        %v558 = vrot.slane %v557, 2
        %v559 = vadd.f32 %v557, %v558
        %v560 = vrot.slane %v559, 1
        %v561 = vadd.f32 %v559, %v560
        %v562 = vadd.f32 %v370, %v373
        %v563 = vrot.slane %v562, 4
        %v564 = vadd.f32 %v562, %v563
        %v565 = vrot.slane %v564, 2
        %v566 = vadd.f32 %v564, %v565
        %v567 = vrot.slane %v566, 1
        %v568 = vadd.f32 %v566, %v567
        %v569 = vadd.f32 %v435, %v438
        %v570 = vrot.slane %v569, 4
        %v571 = vadd.f32 %v569, %v570
        %v572 = vrot.slane %v571, 2
        %v573 = vadd.f32 %v571, %v572
        %v574 = vrot.slane %v573, 1
        %v575 = vadd.f32 %v573, %v574
        %v576 = vadd.f32 %v500, %v503
        %v577 = vrot.slane %v576, 4
        %v578 = vadd.f32 %v576, %v577
        %v579 = vrot.slane %v578, 2
        %v580 = vadd.f32 %v578, %v579
        %v581 = vrot.slane %v580, 1
        %v582 = vadd.f32 %v580, %v581
        %v583 = vadd.f32 %v376, %v379
        %v584 = vrot.slane %v583, 4
        %v585 = vadd.f32 %v583, %v584
        %v586 = vrot.slane %v585, 2
        %v587 = vadd.f32 %v585, %v586
        %v588 = vrot.slane %v587, 1
        %v589 = vadd.f32 %v587, %v588
        %v590 = vadd.f32 %v441, %v444
        %v591 = vrot.slane %v590, 4
        %v592 = vadd.f32 %v590, %v591
        %v593 = vrot.slane %v592, 2
        %v594 = vadd.f32 %v592, %v593
        %v595 = vrot.slane %v594, 1
        %v596 = vadd.f32 %v594, %v595
        %v597 = vadd.f32 %v506, %v509
        %v598 = vrot.slane %v597, 4
        %v599 = vadd.f32 %v597, %v598
        %v600 = vrot.slane %v599, 2
        %v601 = vadd.f32 %v599, %v600
        %v602 = vrot.slane %v601, 1
        %v603 = vadd.f32 %v601, %v602
        %v604 = vadd.f32 %v382, %v385
        %v605 = vrot.slane %v604, 4
        %v606 = vadd.f32 %v604, %v605
        %v607 = vrot.slane %v606, 2
        %v608 = vadd.f32 %v606, %v607
        %v609 = vrot.slane %v608, 1
        %v610 = vadd.f32 %v608, %v609
        %v611 = vadd.f32 %v447, %v450
        %v612 = vrot.slane %v611, 4
        %v613 = vadd.f32 %v611, %v612
        %v614 = vrot.slane %v613, 2
        %v615 = vadd.f32 %v613, %v614
        %v616 = vrot.slane %v615, 1
        %v617 = vadd.f32 %v615, %v616
        %v618 = vadd.f32 %v512, %v515
        %v619 = vrot.slane %v618, 4
        %v620 = vadd.f32 %v618, %v619
        %v621 = vrot.slane %v620, 2
        %v622 = vadd.f32 %v620, %v621
        %v623 = vrot.slane %v622, 1
        %v624 = vadd.f32 %v622, %v623
        %v625 = vadd.f32 %v388, %v391
        %v626 = vrot.slane %v625, 4
        %v627 = vadd.f32 %v625, %v626
        %v628 = vrot.slane %v627, 2
        %v629 = vadd.f32 %v627, %v628
        %v630 = vrot.slane %v629, 1
        %v631 = vadd.f32 %v629, %v630
        %v632 = vadd.f32 %v453, %v456
        %v633 = vrot.slane %v632, 4
        %v634 = vadd.f32 %v632, %v633
        %v635 = vrot.slane %v634, 2
        %v636 = vadd.f32 %v634, %v635
        %v637 = vrot.slane %v636, 1
        %v638 = vadd.f32 %v636, %v637
        %v639 = vadd.f32 %v518, %v521
        %v640 = vrot.slane %v639, 4
        %v641 = vadd.f32 %v639, %v640
        %v642 = vrot.slane %v641, 2
        %v643 = vadd.f32 %v641, %v642
        %v644 = vrot.slane %v643, 1
        %v645 = vadd.f32 %v643, %v644
        %v646 = vadd.f32 %v394, %v397
        %v647 = vrot.slane %v646, 4
        %v648 = vadd.f32 %v646, %v647
        %v649 = vrot.slane %v648, 2
        %v650 = vadd.f32 %v648, %v649
        %v651 = vrot.slane %v650, 1
        %v652 = vadd.f32 %v650, %v651
        %v653 = vadd.f32 %v459, %v462
        %v654 = vrot.slane %v653, 4
        %v655 = vadd.f32 %v653, %v654
        %v656 = vrot.slane %v655, 2
        %v657 = vadd.f32 %v655, %v656
        %v658 = vrot.slane %v657, 1
        %v659 = vadd.f32 %v657, %v658
        %v660 = vadd.f32 %v524, %v527
        %v661 = vrot.slane %v660, 4
        %v662 = vadd.f32 %v660, %v661
        %v663 = vrot.slane %v662, 2
        %v664 = vadd.f32 %v662, %v663
        %v665 = vrot.slane %v664, 1
        %v666 = vadd.f32 %v664, %v665
        %v667 = vadd.f32 %v400, %v403
        %v668 = vrot.slane %v667, 4
        %v669 = vadd.f32 %v667, %v668
        %v670 = vrot.slane %v669, 2
        %v671 = vadd.f32 %v669, %v670
        %v672 = vrot.slane %v671, 1
        %v673 = vadd.f32 %v671, %v672
        %v674 = vadd.f32 %v465, %v468
        %v675 = vrot.slane %v674, 4
        %v676 = vadd.f32 %v674, %v675
        %v677 = vrot.slane %v676, 2
        %v678 = vadd.f32 %v676, %v677
        %v679 = vrot.slane %v678, 1
        %v680 = vadd.f32 %v678, %v679
        %v681 = vadd.f32 %v530, %v533
        %v682 = vrot.slane %v681, 4
        %v683 = vadd.f32 %v681, %v682
        %v684 = vrot.slane %v683, 2
        %v685 = vadd.f32 %v683, %v684
        %v686 = vrot.slane %v685, 1
        %v687 = vadd.f32 %v685, %v686
        %v688 = vadd.f32 %v406, %v409
        %v689 = vrot.slane %v688, 4
        %v690 = vadd.f32 %v688, %v689
        %v691 = vrot.slane %v690, 2
        %v692 = vadd.f32 %v690, %v691
        %v693 = vrot.slane %v692, 1
        %v694 = vadd.f32 %v692, %v693
        %v695 = vadd.f32 %v471, %v474
        %v696 = vrot.slane %v695, 4
        %v697 = vadd.f32 %v695, %v696
        %v698 = vrot.slane %v697, 2
        %v699 = vadd.f32 %v697, %v698
        %v700 = vrot.slane %v699, 1
        %v701 = vadd.f32 %v699, %v700
        %v702 = vadd.f32 %v536, %v539
        %v703 = vrot.slane %v702, 4
        %v704 = vadd.f32 %v702, %v703
        %v705 = vrot.slane %v704, 2
        %v706 = vadd.f32 %v704, %v705
        %v707 = vrot.slane %v706, 1
        %v708 = vadd.f32 %v706, %v707
        %v709 = vrcp.pop 16.0
        %v710 = vmul.f32 16.0, %v709
        %v711 = vsub.f32 1.0, %v710
        %v712 = vmul.f32 %v709, %v711
        %v713 = vadd.f32 %v709, %v712
        %vm714 = vweird.f32 %v709
        %v715 = vsel %vm714, %v709, %v713
        %v716 = vmul.f32 %v547, %v715
        %v717 = vmul.f32 %v554, %v715
        %v718 = vmul.f32 %v561, %v715
        %v719 = vmul.f32 %v568, %v715
        %v720 = vmul.f32 %v575, %v715
        %v721 = vmul.f32 %v582, %v715
        %v722 = vmul.f32 %v589, %v715
        %v723 = vmul.f32 %v596, %v715
        %v724 = vmul.f32 %v603, %v715
        %v725 = vmul.f32 %v610, %v715
        %v726 = vmul.f32 %v617, %v715
        %v727 = vmul.f32 %v624, %v715
        %v728 = vmul.f32 %v631, %v715
        %v729 = vmul.f32 %v638, %v715
        %v730 = vmul.f32 %v645, %v715
        %v731 = vmul.f32 %v652, %v715
        %v732 = vmul.f32 %v659, %v715
        %v733 = vmul.f32 %v666, %v715
        %v734 = vmul.f32 %v673, %v715
        %v735 = vmul.f32 %v680, %v715
        %v736 = vmul.f32 %v687, %v715
        %v737 = vmul.f32 %v694, %v715
        %v738 = vmul.f32 %v701, %v715
        %v739 = vmul.f32 %v708, %v715
        %v740 = vld [vmem:[%s2] sm:$0x7]
        %v742 = vperm.slane %v740, 0
        %v743 = vperm.slane %v740, 1
        %v744 = vperm.slane %v740, 2
        %v748 = vadd.f32 %v716, %v742
        %v749 = vadd.f32 %v717, %v743
        %v750 = vadd.f32 %v718, %v744
        %v751 = vadd.f32 %v719, %v742
        %v752 = vadd.f32 %v720, %v743
        %v753 = vadd.f32 %v721, %v744
        %v754 = vadd.f32 %v722, %v742
        %v755 = vadd.f32 %v723, %v743
        %v756 = vadd.f32 %v724, %v744
        %v757 = vadd.f32 %v725, %v742
        %v758 = vadd.f32 %v726, %v743
        %v759 = vadd.f32 %v727, %v744
        %v760 = vadd.f32 %v728, %v742
        %v761 = vadd.f32 %v729, %v743
        %v762 = vadd.f32 %v730, %v744
        %v763 = vadd.f32 %v731, %v742
        %v764 = vadd.f32 %v732, %v743
        %v765 = vadd.f32 %v733, %v744
        %v766 = vadd.f32 %v734, %v742
        %v767 = vadd.f32 %v735, %v743
        %v768 = vadd.f32 %v736, %v744
        %v769 = vadd.f32 %v737, %v742
        %v770 = vadd.f32 %v738, %v743
        %v771 = vadd.f32 %v739, %v744
        %v772 = vld [vmem:[%s3] sm:$0xff]
        %v773 = vld [vmem:[%s3 + $0x8] sm:$0xff]
        %v774 = vld [vmem:[%s3 + $0x10] sm:$0xff]
        %v775 = vld [vmem:[%s3 + $0x18] sm:$0xff]
        %v776 = vadd.f32 %v429, %v772
        %v777 = vadd.f32 %v494, %v773
        %v778 = vadd.f32 %v432, %v774
        %v779 = vadd.f32 %v497, %v775
        %v780 = vadd.f32 %v435, %v772
        %v781 = vadd.f32 %v500, %v773
        %v782 = vadd.f32 %v438, %v774
        %v783 = vadd.f32 %v503, %v775
        %v784 = vadd.f32 %v441, %v772
        %v785 = vadd.f32 %v506, %v773
        %v786 = vadd.f32 %v444, %v774
        %v787 = vadd.f32 %v509, %v775
        %v788 = vadd.f32 %v447, %v772
        %v789 = vadd.f32 %v512, %v773
        %v790 = vadd.f32 %v450, %v774
        %v791 = vadd.f32 %v515, %v775
        %v792 = vadd.f32 %v453, %v772
        %v793 = vadd.f32 %v518, %v773
        %v794 = vadd.f32 %v456, %v774
        %v795 = vadd.f32 %v521, %v775
        %v796 = vadd.f32 %v459, %v772
        %v797 = vadd.f32 %v524, %v773
        %v798 = vadd.f32 %v462, %v774
        %v799 = vadd.f32 %v527, %v775
        %v800 = vadd.f32 %v465, %v772
        %v801 = vadd.f32 %v530, %v773
        %v802 = vadd.f32 %v468, %v774
        %v803 = vadd.f32 %v533, %v775
        %v804 = vadd.f32 %v471, %v772
        %v805 = vadd.f32 %v536, %v773
        %v806 = vadd.f32 %v474, %v774
        %v807 = vadd.f32 %v539, %v775
        %v808 = vperm.slane %v748, 0
        %v809 = vperm.slane %v751, 0
        %v810 = vperm.slane %v754, 0
        %v811 = vperm.slane %v757, 0
        %v812 = vperm.slane %v760, 0
        %v813 = vperm.slane %v763, 0
        %v814 = vperm.slane %v766, 0
        %v815 = vperm.slane %v769, 0
        %v816 = vmul.f32 %v808, %v776
        %v817 = vmul.f32 %v808, %v778
        %v818 = vmul.f32 %v809, %v780
        %v819 = vmul.f32 %v809, %v782
        %v820 = vmul.f32 %v810, %v784
        %v821 = vmul.f32 %v810, %v786
        %v822 = vmul.f32 %v811, %v788
        %v823 = vmul.f32 %v811, %v790
        %v824 = vmul.f32 %v812, %v792
        %v825 = vmul.f32 %v812, %v794
        %v826 = vmul.f32 %v813, %v796
        %v827 = vmul.f32 %v813, %v798
        %v828 = vmul.f32 %v814, %v800
        %v829 = vmul.f32 %v814, %v802
        %v830 = vmul.f32 %v815, %v804
        %v831 = vmul.f32 %v815, %v806
        %v832 = vld [vmem:[%s4] sm:$0xff]
        %v833 = vld [vmem:[%s4 + $0x8] sm:$0xff]
        %v834 = vld [vmem:[%s4 + $0x10] sm:$0xff]
        %v835 = vld [vmem:[%s4 + $0x18] sm:$0xff]
        %v836 = vld [vmem:[%s4 + $0x20] sm:$0xff]
        %v837 = vld [vmem:[%s4 + $0x28] sm:$0xff]
        %v838 = vld [vmem:[%s4 + $0x30] sm:$0xff]
        %v839 = vld [vmem:[%s4 + $0x38] sm:$0xff]
        %v840 = vld [vmem:[%s4 + $0x40] sm:$0xff]
        %v841 = vld [vmem:[%s4 + $0x48] sm:$0xff]
        %v842 = vld [vmem:[%s4 + $0x50] sm:$0xff]
        %v843 = vld [vmem:[%s4 + $0x58] sm:$0xff]
        %v844 = vld [vmem:[%s4 + $0x60] sm:$0xff]
        %v845 = vld [vmem:[%s4 + $0x68] sm:$0xff]
        %v846 = vld [vmem:[%s4 + $0x70] sm:$0xff]
        %v847 = vld [vmem:[%s4 + $0x78] sm:$0xff]
        %848 = vmatpush.msra.mxu0 %v847
        %849 = vmatpush.msra.mxu0 %v846
        %850 = vmatpush.msra.mxu0 %v845
        %851 = vmatpush.msra.mxu0 %v844
        %852 = vmatpush.msra.mxu0 %v843
        %853 = vmatpush.msra.mxu0 %v842
        %854 = vmatpush.msra.mxu0 %v841
        %855 = vmatpush.msra.mxu0 %v840
        %856 = vmatpush.msra.mxu0 %v839
        %857 = vmatpush.msra.mxu0 %v838
        %858 = vmatpush.msra.mxu0 %v837
        %859 = vmatpush.msra.mxu0 %v836
        %860 = vmatpush.msra.mxu0 %v835
        %861 = vmatpush.msra.mxu0 %v834
        %862 = vmatpush.msra.mxu0 %v833
        %863 = vmatpush.msra.mxu0 %v832
        %864 = vmatmul.f32.gmra.mxu0 %v816
        %v865 = vpop.f32.mrf.mxu0
        %v866 = vadd.f32 0.0, %v865
        %867 = vmatmul.f32.gmra.mxu0 %v817
        %v868 = vpop.f32.mrf.mxu0
        %v869 = vadd.f32 0.0, %v868
        %870 = vmatmul.f32.gmra.mxu0 %v818
        %v871 = vpop.f32.mrf.mxu0
        %v872 = vadd.f32 0.0, %v871
        %873 = vmatmul.f32.gmra.mxu0 %v819
        %v874 = vpop.f32.mrf.mxu0
        %v875 = vadd.f32 0.0, %v874
        %876 = vmatmul.f32.gmra.mxu0 %v820
        %v877 = vpop.f32.mrf.mxu0
        %v878 = vadd.f32 0.0, %v877
        %879 = vmatmul.f32.gmra.mxu0 %v821
        %v880 = vpop.f32.mrf.mxu0
        %v881 = vadd.f32 0.0, %v880
        %882 = vmatmul.f32.gmra.mxu0 %v822
        %v883 = vpop.f32.mrf.mxu0
        %v884 = vadd.f32 0.0, %v883
        %885 = vmatmul.f32.gmra.mxu0 %v823
        %v886 = vpop.f32.mrf.mxu0
        %v887 = vadd.f32 0.0, %v886
        %888 = vmatmul.f32.gmra.mxu0 %v824
        %v889 = vpop.f32.mrf.mxu0
        %v890 = vadd.f32 0.0, %v889
        %891 = vmatmul.f32.gmra.mxu0 %v825
        %v892 = vpop.f32.mrf.mxu0
        %v893 = vadd.f32 0.0, %v892
        %894 = vmatmul.f32.gmra.mxu0 %v826
        %v895 = vpop.f32.mrf.mxu0
        %v896 = vadd.f32 0.0, %v895
        %897 = vmatmul.f32.gmra.mxu0 %v827
        %v898 = vpop.f32.mrf.mxu0
        %v899 = vadd.f32 0.0, %v898
        %900 = vmatmul.f32.gmra.mxu0 %v828
        %v901 = vpop.f32.mrf.mxu0
        %v902 = vadd.f32 0.0, %v901
        %903 = vmatmul.f32.gmra.mxu0 %v829
        %v904 = vpop.f32.mrf.mxu0
        %v905 = vadd.f32 0.0, %v904
        %906 = vmatmul.f32.gmra.mxu0 %v830
        %v907 = vpop.f32.mrf.mxu0
        %v908 = vadd.f32 0.0, %v907
        %909 = vmatmul.f32.gmra.mxu0 %v831
        %v910 = vpop.f32.mrf.mxu0
        %v911 = vadd.f32 0.0, %v910
        %912 = vdwg.mxu0
        %v913 = vmul.f32 %v748, %v749
        %v914 = vmul.f32 %v751, %v752
        %v915 = vmul.f32 %v754, %v755
        %v916 = vmul.f32 %v757, %v758
        %v917 = vmul.f32 %v760, %v761
        %v918 = vmul.f32 %v763, %v764
        %v919 = vmul.f32 %v766, %v767
        %v920 = vmul.f32 %v769, %v770
        %v929 = vrot.slane %v914, 7
        %vm930 = vcmask 1041409
        %v931 = vsel %vm930, %v929, %v913
        %v932 = vrot.slane %v915, 6
        %vm933 = vcmask 1042434
        %v934 = vsel %vm933, %v932, %v931
        %v935 = vrot.slane %v916, 5
        %vm936 = vcmask 1043459
        %v937 = vsel %vm936, %v935, %v934
        %v938 = vrot.slane %v917, 4
        %vm939 = vcmask 1044484
        %v940 = vsel %vm939, %v938, %v937
        %v941 = vrot.slane %v918, 3
        %vm942 = vcmask 1045509
        %v943 = vsel %vm942, %v941, %v940
        %v944 = vrot.slane %v919, 2
        %vm945 = vcmask 1046534
        %v946 = vsel %vm945, %v944, %v943
        %v947 = vrot.slane %v920, 1
        %vm948 = vcmask 1047559
        %v949 = vsel %vm948, %v947, %v946
        %951 = vmatpush.msra.mxu0 %v847
        %952 = vmatpush.msra.mxu0 %v846
        %953 = vmatpush.msra.mxu0 %v845
        %954 = vmatpush.msra.mxu0 %v844
        %955 = vmatpush.msra.mxu0 %v843
        %956 = vmatpush.msra.mxu0 %v842
        %957 = vmatpush.msra.mxu0 %v841
        %958 = vmatpush.msra.mxu0 %v840
        %959 = vmatpush.msra.mxu0 %v839
        %960 = vmatpush.msra.mxu0 %v838
        %961 = vmatpush.msra.mxu0 %v837
        %962 = vmatpush.msra.mxu0 %v836
        %963 = vmatpush.msra.mxu0 %v835
        %964 = vmatpush.msra.mxu0 %v834
        %965 = vmatpush.msra.mxu0 %v833
        %966 = vmatpush.msra.mxu0 %v832
        %967 = vmatmul.f32.gmra.mxu0 %v949
        %v968 = vpop.f32.mrf.mxu0
        %v969 = vadd.f32 0.0, %v968
        %970 = vdwg.mxu0
        %v971 = vmax.f32 %v866, %v869
        %v972 = vrot.slane %v971, 4
        %v973 = vmax.f32 %v971, %v972
        %v974 = vrot.slane %v973, 2
        %v975 = vmax.f32 %v973, %v974
        %v976 = vrot.slane %v975, 1
        %v977 = vmax.f32 %v975, %v976
        %v978 = vmax.f32 %v872, %v875
        %v979 = vrot.slane %v978, 4
        %v980 = vmax.f32 %v978, %v979
        %v981 = vrot.slane %v980, 2
        %v982 = vmax.f32 %v980, %v981
        %v983 = vrot.slane %v982, 1
        %v984 = vmax.f32 %v982, %v983
        %v985 = vmax.f32 %v878, %v881
        %v986 = vrot.slane %v985, 4
        %v987 = vmax.f32 %v985, %v986
        %v988 = vrot.slane %v987, 2
        %v989 = vmax.f32 %v987, %v988
        %v990 = vrot.slane %v989, 1
        %v991 = vmax.f32 %v989, %v990
        %v992 = vmax.f32 %v884, %v887
        %v993 = vrot.slane %v992, 4
        %v994 = vmax.f32 %v992, %v993
        %v995 = vrot.slane %v994, 2
        %v996 = vmax.f32 %v994, %v995
        %v997 = vrot.slane %v996, 1
        %v998 = vmax.f32 %v996, %v997
        %v999 = vmax.f32 %v890, %v893
        %v1000 = vrot.slane %v999, 4
        %v1001 = vmax.f32 %v999, %v1000
        %v1002 = vrot.slane %v1001, 2
        %v1003 = vmax.f32 %v1001, %v1002
        %v1004 = vrot.slane %v1003, 1
        %v1005 = vmax.f32 %v1003, %v1004
        %v1006 = vmax.f32 %v896, %v899
        %v1007 = vrot.slane %v1006, 4
        %v1008 = vmax.f32 %v1006, %v1007
        %v1009 = vrot.slane %v1008, 2
        %v1010 = vmax.f32 %v1008, %v1009
        %v1011 = vrot.slane %v1010, 1
        %v1012 = vmax.f32 %v1010, %v1011
        %v1013 = vmax.f32 %v902, %v905
        %v1014 = vrot.slane %v1013, 4
        %v1015 = vmax.f32 %v1013, %v1014
        %v1016 = vrot.slane %v1015, 2
        %v1017 = vmax.f32 %v1015, %v1016
        %v1018 = vrot.slane %v1017, 1
        %v1019 = vmax.f32 %v1017, %v1018
        %v1020 = vmax.f32 %v908, %v911
        %v1021 = vrot.slane %v1020, 4
        %v1022 = vmax.f32 %v1020, %v1021
        %v1023 = vrot.slane %v1022, 2
        %v1024 = vmax.f32 %v1022, %v1023
        %v1025 = vrot.slane %v1024, 1
        %v1026 = vmax.f32 %v1024, %v1025
        %v1028 = vrot.slane %v969, 1
        %v1029 = vrot.slane %v969, 2
        %v1030 = vrot.slane %v969, 3
        %v1031 = vrot.slane %v969, 4
        %v1032 = vrot.slane %v969, 5
        %v1033 = vrot.slane %v969, 6
        %v1034 = vrot.slane %v969, 7
        %v1043 = vmax.f32 %v977, %v969
        %v1044 = vmax.f32 %v984, %v1028
        %v1045 = vmax.f32 %v991, %v1029
        %v1046 = vmax.f32 %v998, %v1030
        %v1047 = vmax.f32 %v1005, %v1031
        %v1048 = vmax.f32 %v1012, %v1032
        %v1049 = vmax.f32 %v1019, %v1033
        %v1050 = vmax.f32 %v1026, %v1034
        %v1051 = vperm.slane %v1043, 0
        %v1052 = vperm.slane %v1044, 0
        %v1053 = vperm.slane %v1045, 0
        %v1054 = vperm.slane %v1046, 0
        %v1055 = vperm.slane %v1047, 0
        %v1056 = vperm.slane %v1048, 0
        %v1057 = vperm.slane %v1049, 0
        %v1058 = vperm.slane %v1050, 0
        %v1059 = vsub.f32 %v866, %v1051
        %v1060 = vsub.f32 %v869, %v1051
        %v1061 = vsub.f32 %v872, %v1052
        %v1062 = vsub.f32 %v875, %v1052
        %v1063 = vsub.f32 %v878, %v1053
        %v1064 = vsub.f32 %v881, %v1053
        %v1065 = vsub.f32 %v884, %v1054
        %v1066 = vsub.f32 %v887, %v1054
        %v1067 = vsub.f32 %v890, %v1055
        %v1068 = vsub.f32 %v893, %v1055
        %v1069 = vsub.f32 %v896, %v1056
        %v1070 = vsub.f32 %v899, %v1056
        %v1071 = vsub.f32 %v902, %v1057
        %v1072 = vsub.f32 %v905, %v1057
        %v1073 = vsub.f32 %v908, %v1058
        %v1074 = vsub.f32 %v911, %v1058
        %v1075 = vmul.f32 %v1059, 1.442695
        %v1076 = vpow.pop %v1075
        %v1077 = vmul.f32 %v1060, 1.442695
        %v1078 = vpow.pop %v1077
        %v1079 = vmul.f32 %v1061, 1.442695
        %v1080 = vpow.pop %v1079
        %v1081 = vmul.f32 %v1062, 1.442695
        %v1082 = vpow.pop %v1081
        %v1083 = vmul.f32 %v1063, 1.442695
        %v1084 = vpow.pop %v1083
        %v1085 = vmul.f32 %v1064, 1.442695
        %v1086 = vpow.pop %v1085
        %v1087 = vmul.f32 %v1065, 1.442695
        %v1088 = vpow.pop %v1087
        %v1089 = vmul.f32 %v1066, 1.442695
        %v1090 = vpow.pop %v1089
        %v1091 = vmul.f32 %v1067, 1.442695
        %v1092 = vpow.pop %v1091
        %v1093 = vmul.f32 %v1068, 1.442695
        %v1094 = vpow.pop %v1093
        %v1095 = vmul.f32 %v1069, 1.442695
        %v1096 = vpow.pop %v1095
        %v1097 = vmul.f32 %v1070, 1.442695
        %v1098 = vpow.pop %v1097
        %v1099 = vmul.f32 %v1071, 1.442695
        %v1100 = vpow.pop %v1099
        %v1101 = vmul.f32 %v1072, 1.442695
        %v1102 = vpow.pop %v1101
        %v1103 = vmul.f32 %v1073, 1.442695
        %v1104 = vpow.pop %v1103
        %v1105 = vmul.f32 %v1074, 1.442695
        %v1106 = vpow.pop %v1105
        %v1115 = vrot.slane %v1044, 7
        %v1116 = vsel %vm930, %v1115, %v1043
        %v1117 = vrot.slane %v1045, 6
        %v1118 = vsel %vm933, %v1117, %v1116
        %v1119 = vrot.slane %v1046, 5
        %v1120 = vsel %vm936, %v1119, %v1118
        %v1121 = vrot.slane %v1047, 4
        %v1122 = vsel %vm939, %v1121, %v1120
        %v1123 = vrot.slane %v1048, 3
        %v1124 = vsel %vm942, %v1123, %v1122
        %v1125 = vrot.slane %v1049, 2
        %v1126 = vsel %vm945, %v1125, %v1124
        %v1127 = vrot.slane %v1050, 1
        %v1128 = vsel %vm948, %v1127, %v1126
        %v1130 = vsub.f32 %v969, %v1128
        %v1131 = vmul.f32 %v1130, 1.442695
        %v1132 = vpow.pop %v1131
        %v1133 = vadd.f32 %v1076, %v1078
        %v1134 = vrot.slane %v1133, 4
        %v1135 = vadd.f32 %v1133, %v1134
        %v1136 = vrot.slane %v1135, 2
        %v1137 = vadd.f32 %v1135, %v1136
        %v1138 = vrot.slane %v1137, 1
        %v1139 = vadd.f32 %v1137, %v1138
        %v1140 = vadd.f32 %v1080, %v1082
        %v1141 = vrot.slane %v1140, 4
        %v1142 = vadd.f32 %v1140, %v1141
        %v1143 = vrot.slane %v1142, 2
        %v1144 = vadd.f32 %v1142, %v1143
        %v1145 = vrot.slane %v1144, 1
        %v1146 = vadd.f32 %v1144, %v1145
        %v1147 = vadd.f32 %v1084, %v1086
        %v1148 = vrot.slane %v1147, 4
        %v1149 = vadd.f32 %v1147, %v1148
        %v1150 = vrot.slane %v1149, 2
        %v1151 = vadd.f32 %v1149, %v1150
        %v1152 = vrot.slane %v1151, 1
        %v1153 = vadd.f32 %v1151, %v1152
        %v1154 = vadd.f32 %v1088, %v1090
        %v1155 = vrot.slane %v1154, 4
        %v1156 = vadd.f32 %v1154, %v1155
        %v1157 = vrot.slane %v1156, 2
        %v1158 = vadd.f32 %v1156, %v1157
        %v1159 = vrot.slane %v1158, 1
        %v1160 = vadd.f32 %v1158, %v1159
        %v1161 = vadd.f32 %v1092, %v1094
        %v1162 = vrot.slane %v1161, 4
        %v1163 = vadd.f32 %v1161, %v1162
        %v1164 = vrot.slane %v1163, 2
        %v1165 = vadd.f32 %v1163, %v1164
        %v1166 = vrot.slane %v1165, 1
        %v1167 = vadd.f32 %v1165, %v1166
        %v1168 = vadd.f32 %v1096, %v1098
        %v1169 = vrot.slane %v1168, 4
        %v1170 = vadd.f32 %v1168, %v1169
        %v1171 = vrot.slane %v1170, 2
        %v1172 = vadd.f32 %v1170, %v1171
        %v1173 = vrot.slane %v1172, 1
        %v1174 = vadd.f32 %v1172, %v1173
        %v1175 = vadd.f32 %v1100, %v1102
        %v1176 = vrot.slane %v1175, 4
        %v1177 = vadd.f32 %v1175, %v1176
        %v1178 = vrot.slane %v1177, 2
        %v1179 = vadd.f32 %v1177, %v1178
        %v1180 = vrot.slane %v1179, 1
        %v1181 = vadd.f32 %v1179, %v1180
        %v1182 = vadd.f32 %v1104, %v1106
        %v1183 = vrot.slane %v1182, 4
        %v1184 = vadd.f32 %v1182, %v1183
        %v1185 = vrot.slane %v1184, 2
        %v1186 = vadd.f32 %v1184, %v1185
        %v1187 = vrot.slane %v1186, 1
        %v1188 = vadd.f32 %v1186, %v1187
        %v1190 = vrot.slane %v1132, 1
        %v1191 = vrot.slane %v1132, 2
        %v1192 = vrot.slane %v1132, 3
        %v1193 = vrot.slane %v1132, 4
        %v1194 = vrot.slane %v1132, 5
        %v1195 = vrot.slane %v1132, 6
        %v1196 = vrot.slane %v1132, 7
        %v1205 = vadd.f32 %v1139, %v1132
        %v1206 = vadd.f32 %v1146, %v1190
        %v1207 = vadd.f32 %v1153, %v1191
        %v1208 = vadd.f32 %v1160, %v1192
        %v1209 = vadd.f32 %v1167, %v1193
        %v1210 = vadd.f32 %v1174, %v1194
        %v1211 = vadd.f32 %v1181, %v1195
        %v1212 = vadd.f32 %v1188, %v1196
        %v1213 = vrcp.pop %v1205
        %v1214 = vrcp.pop %v1206
        %v1215 = vrcp.pop %v1207
        %v1216 = vrcp.pop %v1208
        %v1217 = vrcp.pop %v1209
        %v1218 = vrcp.pop %v1210
        %v1219 = vrcp.pop %v1211
        %v1220 = vrcp.pop %v1212
        %v1221 = vmul.f32 %v1076, %v777
        %v1222 = vmul.f32 %v1078, %v779
        %v1223 = vmul.f32 %v1080, %v781
        %v1224 = vmul.f32 %v1082, %v783
        %v1225 = vmul.f32 %v1084, %v785
        %v1226 = vmul.f32 %v1086, %v787
        %v1227 = vmul.f32 %v1088, %v789
        %v1228 = vmul.f32 %v1090, %v791
        %v1229 = vmul.f32 %v1092, %v793
        %v1230 = vmul.f32 %v1094, %v795
        %v1231 = vmul.f32 %v1096, %v797
        %v1232 = vmul.f32 %v1098, %v799
        %v1233 = vmul.f32 %v1100, %v801
        %v1234 = vmul.f32 %v1102, %v803
        %v1235 = vmul.f32 %v1104, %v805
        %v1236 = vmul.f32 %v1106, %v807
        %v1237 = vadd.f32 %v1221, %v1222
        %v1238 = vrot.slane %v1237, 4
        %v1239 = vadd.f32 %v1237, %v1238
        %v1240 = vrot.slane %v1239, 2
        %v1241 = vadd.f32 %v1239, %v1240
        %v1242 = vrot.slane %v1241, 1
        %v1243 = vadd.f32 %v1241, %v1242
        %v1244 = vadd.f32 %v1223, %v1224
        %v1245 = vrot.slane %v1244, 4
        %v1246 = vadd.f32 %v1244, %v1245
        %v1247 = vrot.slane %v1246, 2
        %v1248 = vadd.f32 %v1246, %v1247
        %v1249 = vrot.slane %v1248, 1
        %v1250 = vadd.f32 %v1248, %v1249
        %v1251 = vadd.f32 %v1225, %v1226
        %v1252 = vrot.slane %v1251, 4
        %v1253 = vadd.f32 %v1251, %v1252
        %v1254 = vrot.slane %v1253, 2
        %v1255 = vadd.f32 %v1253, %v1254
        %v1256 = vrot.slane %v1255, 1
        %v1257 = vadd.f32 %v1255, %v1256
        %v1258 = vadd.f32 %v1227, %v1228
        %v1259 = vrot.slane %v1258, 4
        %v1260 = vadd.f32 %v1258, %v1259
        %v1261 = vrot.slane %v1260, 2
        %v1262 = vadd.f32 %v1260, %v1261
        %v1263 = vrot.slane %v1262, 1
        %v1264 = vadd.f32 %v1262, %v1263
        %v1265 = vadd.f32 %v1229, %v1230
        %v1266 = vrot.slane %v1265, 4
        %v1267 = vadd.f32 %v1265, %v1266
        %v1268 = vrot.slane %v1267, 2
        %v1269 = vadd.f32 %v1267, %v1268
        %v1270 = vrot.slane %v1269, 1
        %v1271 = vadd.f32 %v1269, %v1270
        %v1272 = vadd.f32 %v1231, %v1232
        %v1273 = vrot.slane %v1272, 4
        %v1274 = vadd.f32 %v1272, %v1273
        %v1275 = vrot.slane %v1274, 2
        %v1276 = vadd.f32 %v1274, %v1275
        %v1277 = vrot.slane %v1276, 1
        %v1278 = vadd.f32 %v1276, %v1277
        %v1279 = vadd.f32 %v1233, %v1234
        %v1280 = vrot.slane %v1279, 4
        %v1281 = vadd.f32 %v1279, %v1280
        %v1282 = vrot.slane %v1281, 2
        %v1283 = vadd.f32 %v1281, %v1282
        %v1284 = vrot.slane %v1283, 1
        %v1285 = vadd.f32 %v1283, %v1284
        %v1286 = vadd.f32 %v1235, %v1236
        %v1287 = vrot.slane %v1286, 4
        %v1288 = vadd.f32 %v1286, %v1287
        %v1289 = vrot.slane %v1288, 2
        %v1290 = vadd.f32 %v1288, %v1289
        %v1291 = vrot.slane %v1290, 1
        %v1292 = vadd.f32 %v1290, %v1291
        %v1301 = vrot.slane %v753, 7
        %v1302 = vsel %vm930, %v1301, %v750
        %v1303 = vrot.slane %v756, 6
        %v1304 = vsel %vm933, %v1303, %v1302
        %v1305 = vrot.slane %v759, 5
        %v1306 = vsel %vm936, %v1305, %v1304
        %v1307 = vrot.slane %v762, 4
        %v1308 = vsel %vm939, %v1307, %v1306
        %v1309 = vrot.slane %v765, 3
        %v1310 = vsel %vm942, %v1309, %v1308
        %v1311 = vrot.slane %v768, 2
        %v1312 = vsel %vm945, %v1311, %v1310
        %v1313 = vrot.slane %v771, 1
        %v1314 = vsel %vm948, %v1313, %v1312
        %v1316 = vmul.f32 %v1132, %v1314
        %v1318 = vrot.slane %v1316, 1
        %v1319 = vrot.slane %v1316, 2
        %v1320 = vrot.slane %v1316, 3
        %v1321 = vrot.slane %v1316, 4
        %v1322 = vrot.slane %v1316, 5
        %v1323 = vrot.slane %v1316, 6
        %v1324 = vrot.slane %v1316, 7
        %v1333 = vadd.f32 %v1243, %v1316
        %v1334 = vadd.f32 %v1250, %v1318
        %v1335 = vadd.f32 %v1257, %v1319
        %v1336 = vadd.f32 %v1264, %v1320
        %v1337 = vadd.f32 %v1271, %v1321
        %v1338 = vadd.f32 %v1278, %v1322
        %v1339 = vadd.f32 %v1285, %v1323
        %v1340 = vadd.f32 %v1292, %v1324
        %v1341 = vmul.f32 %v1333, %v1213
        %v1342 = vmul.f32 %v1334, %v1214
        %v1343 = vmul.f32 %v1335, %v1215
        %v1344 = vmul.f32 %v1336, %v1216
        %v1345 = vmul.f32 %v1337, %v1217
        %v1346 = vmul.f32 %v1338, %v1218
        %v1347 = vmul.f32 %v1339, %v1219
        %v1348 = vmul.f32 %v1340, %v1220
        %v1349 = vld [vmem:[%s5] sm:$0xff]
        %v1350 = vld [vmem:[%s5 + $0x8] sm:$0xff]
        %v1351 = vld [vmem:[%s5 + $0x10] sm:$0xff]
        %v1352 = vld [vmem:[%s5 + $0x18] sm:$0xff]
        %v1353 = vld [vmem:[%s5 + $0x20] sm:$0xff]
        %v1354 = vld [vmem:[%s5 + $0x28] sm:$0xff]
        %v1355 = vld [vmem:[%s5 + $0x30] sm:$0xff]
        %v1356 = vld [vmem:[%s5 + $0x38] sm:$0xff]
        %v1357 = vld [vmem:[%s5 + $0x40] sm:$0xff]
        %v1358 = vld [vmem:[%s5 + $0x48] sm:$0xff]
        %v1359 = vld [vmem:[%s5 + $0x50] sm:$0xff]
        %v1360 = vld [vmem:[%s5 + $0x58] sm:$0xff]
        %v1361 = vld [vmem:[%s5 + $0x60] sm:$0xff]
        %v1362 = vld [vmem:[%s5 + $0x68] sm:$0xff]
        %v1363 = vld [vmem:[%s5 + $0x70] sm:$0xff]
        %v1364 = vld [vmem:[%s5 + $0x78] sm:$0xff]
        %v1365 = vld [vmem:[%s6] sm:$0x1]
        %v1367 = vperm.slane %v1365, 0
        %v1377 = vrot.slane %v1342, 7
        %v1378 = vsel %vm930, %v1377, %v1341
        %v1379 = vrot.slane %v1343, 6
        %v1380 = vsel %vm933, %v1379, %v1378
        %v1381 = vrot.slane %v1344, 5
        %v1382 = vsel %vm936, %v1381, %v1380
        %v1383 = vrot.slane %v1345, 4
        %v1384 = vsel %vm939, %v1383, %v1382
        %v1385 = vrot.slane %v1346, 3
        %v1386 = vsel %vm942, %v1385, %v1384
        %v1387 = vrot.slane %v1347, 2
        %v1388 = vsel %vm945, %v1387, %v1386
        %v1389 = vrot.slane %v1348, 1
        %v1390 = vsel %vm948, %v1389, %v1388
        %1392 = vmatpush.msra.mxu0 %v1364
        %1393 = vmatpush.msra.mxu0 %v1363
        %1394 = vmatpush.msra.mxu0 %v1362
        %1395 = vmatpush.msra.mxu0 %v1361
        %1396 = vmatpush.msra.mxu0 %v1360
        %1397 = vmatpush.msra.mxu0 %v1359
        %1398 = vmatpush.msra.mxu0 %v1358
        %1399 = vmatpush.msra.mxu0 %v1357
        %1400 = vmatpush.msra.mxu0 %v1356
        %1401 = vmatpush.msra.mxu0 %v1355
        %1402 = vmatpush.msra.mxu0 %v1354
        %1403 = vmatpush.msra.mxu0 %v1353
        %1404 = vmatpush.msra.mxu0 %v1352
        %1405 = vmatpush.msra.mxu0 %v1351
        %1406 = vmatpush.msra.mxu0 %v1350
        %1407 = vmatpush.msra.mxu0 %v1349
        %1408 = vmatmul.f32.gmra.mxu0 %v1390
        %v1409 = vpop.f32.mrf.mxu0
        %v1410 = vadd.f32 %v1367, %v1409
        %1411 = vdwg.mxu0
        %1412 = vst [vmem:[%s274] sm:$0xff] %v1410
        %s1413 = sand.u32 %s181, 1
        %s1414 = scalar_lea.sflag [#allocation3], %s1413
        %s1415 = sand.u32 %s181, 1
        %s1416 = smul.addr %s1415, 8
        %s1417 = scalar_lea.vmem [#allocation2], %s1416
        // Predicated region
        $region49: #{attention_pool_2d.1} parent=47 // pred_check
          %p1418 = pneg %p191
        $region50: #{attention_pool_2d.1} parent=47 // pred_check_branch
          %1420 = sbr.rel (%p1418) target = $region52
        $region51: #{attention_pool_2d.1} parent=47 // pred_region
          %1422 = vsyncadd %s1414, 0
          %s1423 = smul.addr %s21, 8
          %s1424 = scalar_lea.hbm %s7, %s1423
          %s1426 = sshll.u32 %s1417, 4
          %s1427 = int_to_ptr.vmem [resolvable:$true] %s1426
          %s1428 = sshll.u32 %s1424, 4
          %s1429 = int_to_ptr.hbm [resolvable:$true] %s1428
          %1431 = dma.vmem_to_hbm [thread:$0]  %s1427, 128, %s1429, %s1414
        $region52: #{attention_pool_2d.1} parent=47 // pred_fallthru
          _
      $region48: #{attention_pool_2d.1} parent=5 // pred_fallthru
        _
      %p1432 = scmp.le.s32.totalorder 2, %s16
      // Predicated region
      $region53: #{attention_pool_2d.1} parent=5 // pred_check
        %p1433 = pneg %p1432
      $region54: #{attention_pool_2d.1} parent=5 // pred_check_branch
        %1435 = sbr.rel (%p1433) target = $region56
      $region55: #{attention_pool_2d.1} parent=5 // pred_region
        %s1436 = ssub.s32 %s16, 2
        // Predicated region
        $region57: #{attention_pool_2d.1} parent=55 // pred_check
          %p1437 = pneg %p197
        $region58: #{attention_pool_2d.1} parent=55 // pred_check_branch
          %1439 = sbr.rel (%p1437) target = $region60
        $region59: #{attention_pool_2d.1} parent=55 // pred_region
          %s1440 = sand.u32 %s182, 1
          %s1441 = scalar_lea.sflag [#allocation3], %s1440
          %s1442 = sand.u32 %s182, 1
          %s1443 = smul.addr %s1442, 8
          %s1444 = scalar_lea.vmem [#allocation2], %s1443
          %1446 = dma.done %s1441, 128
        $region60: #{attention_pool_2d.1} parent=55 // pred_fallthru
          _
      $region56: #{attention_pool_2d.1} parent=5 // pred_fallthru
        _
    $region6: #{attention_pool_2d.1} parent=1 // loop_footer
      %s20 = sadd.s32 1, %s16
    $region7: #{attention_pool_2d.1} parent=1 // loop_footer_branch
      %15 = sbr.rel target = $region3
    $region8: #{attention_pool_2d.1} parent=1 // loop_exit
      _
    %1447 = vsyncpa [#allocation3], 1
    %s1448 = scalar_lea.sflag [#allocation3], 1
    %1449 = vsyncpa %s1448, 1

</llo_original>
